<compile_context>
chip_gen: v7x
topology: tpu7x:2x2x1
jax: 0.10.0
libtpu: 0.0.40
codegen_flags: <defaults>
</compile_context>

<pallas_src>
import functools

import jax
import jax.numpy as jnp
from jax.experimental import pallas as pl
from jax.experimental.pallas import tpu as pltpu

EPS = 1e-3  # BatchNorm2d(eps=0.001)


def conv_bn_kernel(x_ref, w_ref, gamma_ref, beta_ref, o_ref):
    # x_ref:     (M, K)   bf16, full (batch*spatial) x input-channel tile,
    #            resident across grid steps (constant index_map -> single DMA).
    # w_ref:     (K, TN)  bf16 weight column tile (the only streamed operand).
    # gamma_ref: (1, TN)  f32
    # beta_ref:  (1, TN)  f32
    # o_ref:     (M, TN)  f32, lane-dense (TN is a multiple of 128).
    y = jnp.dot(x_ref[...], w_ref[...], preferred_element_type=jnp.float32)  # (M, TN)
    inv_m = 1.0 / y.shape[0]
    mean = jnp.sum(y, axis=0, keepdims=True) * inv_m                # E[y]
    centered = y - mean
    var = jnp.sum(centered * centered, axis=0, keepdims=True) * inv_m  # biased var (training BN)
    scale = gamma_ref[...] * jax.lax.rsqrt(var + EPS)               # (1, TN)
    o_ref[...] = (centered * scale + beta_ref[...]).astype(o_ref.dtype)


def prepare_conv_bn_params(weight, gamma, beta):
    """One-time (init-time) parameter transform. Keep OFF the hot path.

    weight: (C_out, C_in, 1, 1) f32  ->  (C_in, C_out) bf16
    gamma/beta: (C_out,) f32         ->  (1, C_out) f32
    """
    c_out, c_in = weight.shape[0], weight.shape[1]
    w_mat = jnp.transpose(weight.reshape(c_out, c_in), (1, 0)).astype(jnp.bfloat16)
    gamma2d = gamma.reshape(1, c_out).astype(jnp.float32)
    beta2d = beta.reshape(1, c_out).astype(jnp.float32)
    return w_mat, gamma2d, beta2d


@functools.partial(jax.jit, static_argnames=("tn",))
def conv2d_1x1_batchnorm(x_nchw, w_mat, gamma2d, beta2d, *, tn=1152):
    """x_nchw: (N, C_in, H, W) f32; w_mat: (C_in, C_out) bf16; gamma2d/beta2d: (1, C_out) f32."""
    n, c_in, h, w = x_nchw.shape
    c_out = w_mat.shape[1]
    m = n * h * w
    assert c_out % tn == 0

    # x glue: NCHW -> (M, K) bf16. ~37 KB write, negligible vs the weight stream.
    x_mat = jnp.transpose(x_nchw, (0, 2, 3, 1)).reshape(m, c_in).astype(jnp.bfloat16)

    grid = (c_out // tn,)  # 2 tiles -> one per TensorCore on v7x, pipelined on v5e/v6e

    out_mat = pl.pallas_call(
        conv_bn_kernel,
        out_shape=jax.ShapeDtypeStruct((m, c_out), jnp.float32),
        grid_spec=pltpu.PrefetchScalarGridSpec(
            num_scalar_prefetch=0,
            grid=grid,
            in_specs=[
                # x: full block, constant index -> fetched once, reused on step 2.
                pl.BlockSpec((m, c_in), lambda j: (0, 0)),
                # weight column tile: the only per-step DMA (double-buffered by default).
                pl.BlockSpec((c_in, tn), lambda j: (0, j)),
                pl.BlockSpec((1, tn), lambda j: (0, j)),   # gamma tile
                pl.BlockSpec((1, tn), lambda j: (0, j)),   # beta tile
            ],
            out_specs=pl.BlockSpec((m, tn), lambda j: (0, j)),
        ),
        compiler_params=pltpu.CompilerParams(
            dimension_semantics=("parallel",),
        ),
    )(x_mat, w_mat, gamma2d, beta2d)

    # Module contract returns NCHW.
    # TODO(synk): drop this transpose if the downstream consumer accepts NHWC/(M, C_out).
    return jnp.transpose(out_mat.reshape(n, h, w, c_out), (0, 3, 1, 2))


def reference(x_nchw, weight, gamma, beta):
    n, c_in, h, w = x_nchw.shape
    c_out = weight.shape[0]
    x_mat = jnp.transpose(x_nchw, (0, 2, 3, 1)).reshape(n * h * w, c_in)
    w_mat = jnp.transpose(weight.reshape(c_out, c_in), (1, 0))
    y = x_mat @ w_mat
    mean = jnp.mean(y, axis=0, keepdims=True)
    var = jnp.mean((y - mean) ** 2, axis=0, keepdims=True)
    yn = (y - mean) * jax.lax.rsqrt(var + EPS) * gamma.reshape(1, -1) + beta.reshape(1, -1)
    return jnp.transpose(yn.reshape(n, h, w, c_out), (0, 3, 1, 2))


if __name__ == "__main__":
    key = jax.random.PRNGKey(0)
    kx, kw = jax.random.split(key)

    N, C_IN, H, W = 1, 384, 7, 7
    C_OUT = 2304

    # Deterministic synthetic parameters (shapes from the module __init__).
    x = jax.random.normal(kx, (N, C_IN, H, W), dtype=jnp.float32)
    # Conv2d(384, 2304, 1, bias=False): weight (2304, 384, 1, 1)
    weight = jax.random.normal(kw, (C_OUT, C_IN, 1, 1), dtype=jnp.float32) * 0.02
    # BatchNorm2d default init: gamma=1, beta=0
    gamma = jnp.ones((C_OUT,), dtype=jnp.float32)
    beta = jnp.zeros((C_OUT,), dtype=jnp.float32)

    # One-time parameter prep (off the hot path).
    params = prepare_conv_bn_params(weight, gamma, beta)
    params = jax.block_until_ready(params)
    w_mat, gamma2d, beta2d = params

    out = conv2d_1x1_batchnorm(x, w_mat, gamma2d, beta2d)
    out = jax.block_until_ready(out)

    ref = reference(x, weight, gamma, beta)
    assert out.shape == (N, C_OUT, H, W), out.shape
    # bf16 matmul operands (f32 accumulate) -> slightly looser tolerance vs f32 reference.
    assert jnp.allclose(out, ref, atol=3e-2, rtol=3e-2), float(jnp.max(jnp.abs(out - ref)))

    print("KERNEL_OK")
</pallas_src>

<mosaic_0001>
module attributes {stable_mosaic.version = 11 : i64} {
  func.func @conv_bn_kernel(%arg0: i32, %arg1: memref<49x384xbf16, #tpu.memory_space<vmem>>, %arg2: memref<384x1152xbf16, #tpu.memory_space<vmem>>, %arg3: memref<1x1152xf32, #tpu.memory_space<vmem>>, %arg4: memref<1x1152xf32, #tpu.memory_space<vmem>>, %arg5: memref<49x1152xf32, #tpu.memory_space<vmem>>) attributes {dimension_semantics = [#tpu.dimension_semantics<parallel>], iteration_bounds = array<i64: 2>, scalar_prefetch = 0 : i64, scratch_operands = 0 : i64, tpu.core_type = #tpu.core_type<tc>, window_params = [{pipeline_mode = #tpu.pipeline_mode<synchronous>, transform_indices = @transform_0, window_bounds = array<i64: 49, 384>}, {transform_indices = @transform_1, window_bounds = array<i64: 384, 1152>}, {transform_indices = @transform_2, window_bounds = array<i64: 1, 1152>}, {transform_indices = @transform_3, window_bounds = array<i64: 1, 1152>}, {transform_indices = @transform_4, window_bounds = array<i64: 49, 1152>}]} {
    %c0 = arith.constant 0 : index
    %c0_0 = arith.constant 0 : index
    %0 = vector.load %arg1[%c0, %c0_0] : memref<49x384xbf16, #tpu.memory_space<vmem>>, vector<49x384xbf16>
    %c0_1 = arith.constant 0 : index
    %c0_2 = arith.constant 0 : index
    %1 = vector.load %arg2[%c0_1, %c0_2] : memref<384x1152xbf16, #tpu.memory_space<vmem>>, vector<384x1152xbf16>
    %cst = arith.constant dense<0.000000e+00> : vector<49x1152xf32>
    %2 = tpu.matmul %0, %1, %cst {dimension_numbers = #tpu.dot_dimension_numbers<[1], [0], [0], [1], [0, 0, 1, 1], [], []>} : vector<49x384xbf16>, vector<384x1152xbf16>, vector<49x1152xf32> -> vector<49x1152xf32>
    %cst_3 = arith.constant dense<0.000000e+00> : vector<1152xf32>
    %3 = vector.multi_reduction <add>, %2, %cst_3 [0] : vector<49x1152xf32> to vector<1152xf32>
    %4 = vector.shape_cast %3 : vector<1152xf32> to vector<1x1152xf32>
    %cst_4 = arith.constant 0.0204081628 : f32
    %5 = vector.broadcast %cst_4 : f32 to vector<1x1152xf32>
    %6 = arith.mulf %4, %5 : vector<1x1152xf32>
    %7 = vector.broadcast %6 : vector<1x1152xf32> to vector<49x1152xf32>
    %8 = arith.subf %2, %7 : vector<49x1152xf32>
    %9 = arith.mulf %8, %8 : vector<49x1152xf32>
    %cst_5 = arith.constant dense<0.000000e+00> : vector<1152xf32>
    %10 = vector.multi_reduction <add>, %9, %cst_5 [0] : vector<49x1152xf32> to vector<1152xf32>
    %11 = vector.shape_cast %10 : vector<1152xf32> to vector<1x1152xf32>
    %cst_6 = arith.constant 0.0204081628 : f32
    %12 = vector.broadcast %cst_6 : f32 to vector<1x1152xf32>
    %13 = arith.mulf %11, %12 : vector<1x1152xf32>
    %c0_7 = arith.constant 0 : index
    %c0_8 = arith.constant 0 : index
    %14 = vector.load %arg3[%c0_7, %c0_8] : memref<1x1152xf32, #tpu.memory_space<vmem>>, vector<1x1152xf32>
    %cst_9 = arith.constant 1.000000e-03 : f32
    %15 = vector.broadcast %cst_9 : f32 to vector<1x1152xf32>
    %16 = arith.addf %13, %15 : vector<1x1152xf32>
    %17 = math.rsqrt %16 : vector<1x1152xf32>
    %18 = arith.mulf %14, %17 : vector<1x1152xf32>
    %19 = vector.broadcast %18 : vector<1x1152xf32> to vector<49x1152xf32>
    %20 = arith.mulf %8, %19 : vector<49x1152xf32>
    %c0_10 = arith.constant 0 : index
    %c0_11 = arith.constant 0 : index
    %21 = vector.load %arg4[%c0_10, %c0_11] : memref<1x1152xf32, #tpu.memory_space<vmem>>, vector<1x1152xf32>
    %22 = vector.broadcast %21 : vector<1x1152xf32> to vector<49x1152xf32>
    %23 = arith.addf %20, %22 : vector<49x1152xf32>
    %c0_12 = arith.constant 0 : index
    %c0_13 = arith.constant 0 : index
    %24 = vector.load %arg5[%c0_12, %c0_13] : memref<49x1152xf32, #tpu.memory_space<vmem>>, vector<49x1152xf32>
    tpu.vector_store %arg5[%c0_12, %c0_13], %23 {strides = array<i32>} : memref<49x1152xf32, #tpu.memory_space<vmem>>, vector<49x1152xf32>,
    return
  }
  func.func @transform_0(%arg0: i32) -> (i32, i32) {
    %c0_i32 = arith.constant 0 : i32
    %c0_i32_0 = arith.constant 0 : i32
    %c0_i32_1 = arith.constant 0 : i32
    return %c0_i32, %c0_i32_0 : i32, i32
  }
  func.func @transform_1(%arg0: i32) -> (i32, i32) {
    %c0_i32 = arith.constant 0 : i32
    %c0_i32_0 = arith.constant 0 : i32
    return %c0_i32, %arg0 : i32, i32
  }
  func.func @transform_2(%arg0: i32) -> (i32, i32) {
    %c0_i32 = arith.constant 0 : i32
    %c0_i32_0 = arith.constant 0 : i32
    return %c0_i32, %arg0 : i32, i32
  }
  func.func @transform_3(%arg0: i32) -> (i32, i32) {
    %c0_i32 = arith.constant 0 : i32
    %c0_i32_0 = arith.constant 0 : i32
    return %c0_i32, %arg0 : i32, i32
  }
  func.func @transform_4(%arg0: i32) -> (i32, i32) {
    %c0_i32 = arith.constant 0 : i32
    %c0_i32_0 = arith.constant 0 : i32
    return %c0_i32, %arg0 : i32, i32
  }
}

</mosaic_0001>

<llo_original>
// kernel: conv2d_1x1_batchnorm.1
$region0: #{conv2d_1x1_batchnorm.1}
  #allocation0 [shape = 'u32[]', space=smem, size = 0x4, offset = 0x4, fixed_abs, tag = 'smem constant byte address 0x4 - core index']
  #allocation1 [shape = 'u32[144,128]{1,0:T(1,128)}', space=vmem, size = 0x12000, scoped, tag = 'internal scratch']
  %s0 = inlined_call_operand.vmem [shape: bf16[49,384], index: 0, kind: input, shape index: {}]
  %s1 = inlined_call_operand.hbm [shape: bf16[384,2304], index: 1, kind: input, shape index: {}]
  %s2 = inlined_call_operand.hbm [shape: f32[1,2304], index: 2, kind: input, shape index: {}]
  %s3 = inlined_call_operand.hbm [shape: f32[1,2304], index: 3, kind: input, shape index: {}]
  %s4 = inlined_call_operand.vmem [shape: f32[49,2304], index: 4, kind: output, shape index: {}]
  %s5 = sld [smem:[#allocation0]]
  $region80: #{conv2d_1x1_batchnorm.1} parent=0
    _
  %s7 = ssub.s32 1, %s5
  %s8 = scalar_select 0, %s7, %s5
  $region1: #{conv2d_1x1_batchnorm.1} parent=0
    #allocation2 [shape = 'u8[1769472]{0}', space=vmem, size = 0x1b0000, scoped, tag = 'input window, operand 1']
    #allocation3 [shape = 's32[2]{0}', space=sflag, size = 0x8, scoped, tag = 'scoped memory for conv2d_1x1_batchnorm.1']
    #allocation4 [shape = 'u8[9216]{0}', space=vmem, size = 0x2400, scoped, tag = 'input window, operand 2']
    #allocation5 [shape = 's32[2]{0}', space=sflag, size = 0x8, scoped, tag = 'scoped memory for conv2d_1x1_batchnorm.1']
    #allocation6 [shape = 'u8[9216]{0}', space=vmem, size = 0x2400, scoped, tag = 'input window, operand 3']
    #allocation7 [shape = 'u8[516096]{0}', space=vmem, size = 0x7e000, scoped, tag = 'output window, operand 0']
    %9 = vsyncpa [#allocation3], 0
    %s10 = scalar_lea.sflag [#allocation3], 1
    %11 = vsyncpa %s10, 0
    %12 = vsyncpa [#allocation5], 0
    %s13 = scalar_lea.sflag [#allocation5], 1
    %14 = vsyncpa %s13, 0
    loop: start=0, step=1, limit=4
    $region2: #{conv2d_1x1_batchnorm.1} parent=1 // loop_pre_header
      _
    $region3: #{conv2d_1x1_batchnorm.1} parent=1 // loop_header
      %s16 = sphi 0, %s20
      %p17 = scmp.ge.s32.totalorder %s16, 4
      %s24 = sphi 0, %s24
      %s26 = sphi 0, %s24
      %s27 = sphi 0, %s26
      %s41 = sphi 0, %s27
      %s47 = sphi 0, %s49
      %s50 = sphi 0, %s47
      %s51 = sphi 0, %s50
      %s67 = sphi 0, %s51
      %s73 = sphi 0, %s75
      %s76 = sphi 0, %s73
      %s77 = sphi 0, %s76
      %s93 = sphi 0, %s77
      %s99 = sphi 0, %s101
      %s102 = sphi 0, %s99
      %s103 = sphi 0, %s102
      %s119 = sphi 0, %s103
      %s125 = sphi 0, %s127
      %s128 = sphi 0, %s125
      %s129 = sphi 0, %s128
      %s145 = sphi 0, %s129
    $region4: #{conv2d_1x1_batchnorm.1} parent=1 // loop_header_branch
      %19 = sbr.rel (%p17) target = $region8
    $region5: #{conv2d_1x1_batchnorm.1} parent=1 // loop_body
      %s21 = ssub.s32 %s16, 1
      %s22 = ssub.s32 %s16, 2
      %s23 = sadd.s32 %s16, 1
      %s25 = sadd.s32 %s24, 1
      %p28 = scmp.eq.s32.totalorder %s16, 1
      %p29 = scmp.ne.s32.totalorder %s24, %s26
      %p30 = scmp.eq.s32.totalorder %s16, 0
      %p31 = por %p29, %p30
      %p32 = scmp.ne.s32.totalorder %s24, %s26
      %p33 = scmp.eq.s32.totalorder %s21, 1
      %p34 = por %p32, %p33
      %p35 = scmp.ne.s32.totalorder %s26, %s27
      %p36 = scmp.eq.s32.totalorder %s21, 0
      %p37 = por %p35, %p36
      %p38 = scmp.ne.s32.totalorder %s26, %s27
      %p39 = scmp.eq.s32.totalorder %s22, 1
      %p40 = por %p38, %p39
      %p42 = scmp.ne.s32.totalorder %s27, %s41
      %p43 = scmp.eq.s32.totalorder %s22, 0
      %p44 = por %p42, %p43
      %s45 = ssub.s32 %s16, %s23
      %p46 = scmp.eq.s32.totalorder %s45, 0
      %s48 = sadd.s32 %s47, 1
      %s49 = scalar_select %p46, %s47, %s48
      %p52 = pneg %p46
      %p53 = scmp.eq.s32.totalorder %s16, 1
      %p54 = por %p52, %p53
      %p55 = scmp.ne.s32.totalorder %s47, %s50
      %p56 = scmp.eq.s32.totalorder %s16, 0
      %p57 = por %p55, %p56
      %p58 = scmp.ne.s32.totalorder %s47, %s50
      %p59 = scmp.eq.s32.totalorder %s21, 1
      %p60 = por %p58, %p59
      %p61 = scmp.ne.s32.totalorder %s50, %s51
      %p62 = scmp.eq.s32.totalorder %s21, 0
      %p63 = por %p61, %p62
      %p64 = scmp.ne.s32.totalorder %s50, %s51
      %p65 = scmp.eq.s32.totalorder %s22, 1
      %p66 = por %p64, %p65
      %p68 = scmp.ne.s32.totalorder %s51, %s67
      %p69 = scmp.eq.s32.totalorder %s22, 0
      %p70 = por %p68, %p69
      %s71 = ssub.s32 %s16, %s23
      %p72 = scmp.eq.s32.totalorder %s71, 0
      %s74 = sadd.s32 %s73, 1
      %s75 = scalar_select %p72, %s73, %s74
      %p78 = pneg %p72
      %p79 = scmp.eq.s32.totalorder %s16, 1
      %p80 = por %p78, %p79
      %p81 = scmp.ne.s32.totalorder %s73, %s76
      %p82 = scmp.eq.s32.totalorder %s16, 0
      %p83 = por %p81, %p82
      %p84 = scmp.ne.s32.totalorder %s73, %s76
      %p85 = scmp.eq.s32.totalorder %s21, 1
      %p86 = por %p84, %p85
      %p87 = scmp.ne.s32.totalorder %s76, %s77
      %p88 = scmp.eq.s32.totalorder %s21, 0
      %p89 = por %p87, %p88
      %p90 = scmp.ne.s32.totalorder %s76, %s77
      %p91 = scmp.eq.s32.totalorder %s22, 1
      %p92 = por %p90, %p91
      %p94 = scmp.ne.s32.totalorder %s77, %s93
      %p95 = scmp.eq.s32.totalorder %s22, 0
      %p96 = por %p94, %p95
      %s97 = ssub.s32 %s16, %s23
      %p98 = scmp.eq.s32.totalorder %s97, 0
      %s100 = sadd.s32 %s99, 1
      %s101 = scalar_select %p98, %s99, %s100
      %p104 = pneg %p98
      %p105 = scmp.eq.s32.totalorder %s16, 1
      %p106 = por %p104, %p105
      %p107 = scmp.ne.s32.totalorder %s99, %s102
      %p108 = scmp.eq.s32.totalorder %s16, 0
      %p109 = por %p107, %p108
      %p110 = scmp.ne.s32.totalorder %s99, %s102
      %p111 = scmp.eq.s32.totalorder %s21, 1
      %p112 = por %p110, %p111
      %p113 = scmp.ne.s32.totalorder %s102, %s103
      %p114 = scmp.eq.s32.totalorder %s21, 0
      %p115 = por %p113, %p114
      %p116 = scmp.ne.s32.totalorder %s102, %s103
      %p117 = scmp.eq.s32.totalorder %s22, 1
      %p118 = por %p116, %p117
      %p120 = scmp.ne.s32.totalorder %s103, %s119
      %p121 = scmp.eq.s32.totalorder %s22, 0
      %p122 = por %p120, %p121
      %s123 = ssub.s32 %s16, %s23
      %p124 = scmp.eq.s32.totalorder %s123, 0
      %s126 = sadd.s32 %s125, 1
      %s127 = scalar_select %p124, %s125, %s126
      %p130 = pneg %p124
      %p131 = scmp.eq.s32.totalorder %s16, 1
      %p132 = por %p130, %p131
      %p133 = scmp.ne.s32.totalorder %s125, %s128
      %p134 = scmp.eq.s32.totalorder %s16, 0
      %p135 = por %p133, %p134
      %p136 = scmp.ne.s32.totalorder %s125, %s128
      %p137 = scmp.eq.s32.totalorder %s21, 1
      %p138 = por %p136, %p137
      %p139 = scmp.ne.s32.totalorder %s128, %s129
      %p140 = scmp.eq.s32.totalorder %s21, 0
      %p141 = por %p139, %p140
      %p142 = scmp.ne.s32.totalorder %s128, %s129
      %p143 = scmp.eq.s32.totalorder %s22, 1
      %p144 = por %p142, %p143
      %p146 = scmp.ne.s32.totalorder %s129, %s145
      %p147 = scmp.eq.s32.totalorder %s22, 0
      %p148 = por %p146, %p147
      %p149 = scmp.le.s32.totalorder 1, %s16
      %p150 = scmp.lt.s32.totalorder %s16, 3
      %p151 = pnand %p149, %p150
      %p152 = pneg %p151
      // Predicated region
      $region9: #{conv2d_1x1_batchnorm.1} parent=5 // pred_check
        _
      $region10: #{conv2d_1x1_batchnorm.1} parent=5 // pred_check_branch
        %154 = sbr.rel (%p151) target = $region12
      $region11: #{conv2d_1x1_batchnorm.1} parent=5 // pred_region
        %s155 = ssub.s32 %s16, 1
        // Predicated region
        $region13: #{conv2d_1x1_batchnorm.1} parent=11 // pred_check
          %p156 = pneg %p37
        $region14: #{conv2d_1x1_batchnorm.1} parent=11 // pred_check_branch
          %158 = sbr.rel (%p156) target = $region16
        $region15: #{conv2d_1x1_batchnorm.1} parent=11 // pred_region
          _
        $region16: #{conv2d_1x1_batchnorm.1} parent=11 // pred_fallthru
          _
      $region12: #{conv2d_1x1_batchnorm.1} parent=5 // pred_fallthru
        _
      %p159 = scmp.lt.s32.totalorder %s16, 2
      // Predicated region
      $region17: #{conv2d_1x1_batchnorm.1} parent=5 // pred_check
        %p160 = pneg %p159
      $region18: #{conv2d_1x1_batchnorm.1} parent=5 // pred_check_branch
        %162 = sbr.rel (%p160) target = $region20
      $region19: #{conv2d_1x1_batchnorm.1} parent=5 // pred_region
        // Predicated region
        $region21: #{conv2d_1x1_batchnorm.1} parent=19 // pred_check
          %p163 = pneg %p57
        $region22: #{conv2d_1x1_batchnorm.1} parent=19 // pred_check_branch
          %165 = sbr.rel (%p163) target = $region24
        $region23: #{conv2d_1x1_batchnorm.1} parent=19 // pred_region
          %s166 = sand.u32 %s47, 1
          %s167 = scalar_lea.sflag [#allocation3], %s166
          %s168 = sand.u32 %s47, 1
          %s169 = smul.addr %s168, 1728
          %s170 = scalar_lea.vmem [#allocation2], %s169
          %s171 = smul.u32 9, %s16
          %s173 = ssub.s32 27648, 27648
          %174 = vsyncadd %s167, %s173
          %s175 = smul.addr %s171, 64
          %s176 = scalar_lea.hbm %s1, %s175
          %s177 = sshll.u32 %s170, 4
          %s178 = int_to_ptr.vmem [resolvable:$true] %s177
          %183 = dma.hbm_to_vmem [thread:$0]  %s176, 27648, %s178, %s167, 1152, 576, 36
        $region24: #{conv2d_1x1_batchnorm.1} parent=19 // pred_fallthru
          _
        // Predicated region
        $region25: #{conv2d_1x1_batchnorm.1} parent=19 // pred_check
          %p184 = pneg %p83
        $region26: #{conv2d_1x1_batchnorm.1} parent=19 // pred_check_branch
          %186 = sbr.rel (%p184) target = $region28
        $region27: #{conv2d_1x1_batchnorm.1} parent=19 // pred_region
          %s187 = sand.u32 %s16, 1
          %s188 = scalar_lea.sflag [#allocation5], %s187
          %s189 = sand.u32 %s73, 1
          %s190 = smul.addr %s189, 9
          %s191 = scalar_lea.vmem [#allocation4], %s190
          %s192 = smul.u32 9, %s16
          %s194 = ssub.s32 144, 144
          %195 = vsyncadd %s188, %s194
          %s196 = smul.addr %s192, 16
          %s197 = scalar_lea.hbm %s2, %s196
          %s199 = sshll.u32 %s191, 4
          %s200 = int_to_ptr.vmem [resolvable:$true] %s199
          %202 = dma.hbm_to_vmem [thread:$0]  %s197, 144, %s200, %s188
        $region28: #{conv2d_1x1_batchnorm.1} parent=19 // pred_fallthru
          _
        // Predicated region
        $region29: #{conv2d_1x1_batchnorm.1} parent=19 // pred_check
          %p203 = pneg %p109
        $region30: #{conv2d_1x1_batchnorm.1} parent=19 // pred_check_branch
          %205 = sbr.rel (%p203) target = $region32
        $region31: #{conv2d_1x1_batchnorm.1} parent=19 // pred_region
          %s206 = sand.u32 %s16, 1
          %s207 = scalar_lea.sflag [#allocation5], %s206
          %s208 = sand.u32 %s99, 1
          %s209 = smul.addr %s208, 9
          %s210 = scalar_lea.vmem [#allocation6], %s209
          %s211 = smul.u32 9, %s16
          %s213 = ssub.s32 144, 144
          %214 = vsyncadd %s207, %s213
          %s215 = smul.addr %s211, 16
          %s216 = scalar_lea.hbm %s3, %s215
          %s218 = sshll.u32 %s210, 4
          %s219 = int_to_ptr.vmem [resolvable:$true] %s218
          %221 = dma.hbm_to_vmem [thread:$0]  %s216, 144, %s219, %s207
        $region32: #{conv2d_1x1_batchnorm.1} parent=19 // pred_fallthru
          _
      $region20: #{conv2d_1x1_batchnorm.1} parent=5 // pred_fallthru
        _
      %p222 = scmp.le.s32.totalorder 1, %s16
      %p223 = scmp.lt.s32.totalorder %s16, 3
      %p224 = pnand %p222, %p223
      %p225 = pneg %p224
      // Predicated region
      $region33: #{conv2d_1x1_batchnorm.1} parent=5 // pred_check
        _
      $region34: #{conv2d_1x1_batchnorm.1} parent=5 // pred_check_branch
        %227 = sbr.rel (%p224) target = $region36
      $region35: #{conv2d_1x1_batchnorm.1} parent=5 // pred_region
        %s228 = ssub.s32 %s16, 1
        %s229 = sand.u32 %s50, 1
        %s230 = scalar_lea.sflag [#allocation3], %s229
        %s231 = sand.u32 %s50, 1
        %s232 = smul.addr %s231, 1728
        %s233 = scalar_lea.vmem [#allocation2], %s232
        // Predicated region
        $region37: #{conv2d_1x1_batchnorm.1} parent=35 // pred_check
          %p234 = pneg %p63
        $region38: #{conv2d_1x1_batchnorm.1} parent=35 // pred_check_branch
          %236 = sbr.rel (%p234) target = $region40
        $region39: #{conv2d_1x1_batchnorm.1} parent=35 // pred_region
          %237 = dma.done %s230, 27648
        $region40: #{conv2d_1x1_batchnorm.1} parent=35 // pred_fallthru
          _
        %s238 = sand.u32 %s21, 1
        %s239 = scalar_lea.sflag [#allocation5], %s238
        %s240 = sand.u32 %s76, 1
        %s241 = smul.addr %s240, 9
        %s242 = scalar_lea.vmem [#allocation4], %s241
        // Predicated region
        $region41: #{conv2d_1x1_batchnorm.1} parent=35 // pred_check
          %p243 = pneg %p89
        $region42: #{conv2d_1x1_batchnorm.1} parent=35 // pred_check_branch
          %245 = sbr.rel (%p243) target = $region44
        $region43: #{conv2d_1x1_batchnorm.1} parent=35 // pred_region
          %246 = dma.done %s239, 144
        $region44: #{conv2d_1x1_batchnorm.1} parent=35 // pred_fallthru
          _
        %s247 = sand.u32 %s21, 1
        %s248 = scalar_lea.sflag [#allocation5], %s247
        %s249 = sand.u32 %s102, 1
        %s250 = smul.addr %s249, 9
        %s251 = scalar_lea.vmem [#allocation6], %s250
        // Predicated region
        $region45: #{conv2d_1x1_batchnorm.1} parent=35 // pred_check
          %p252 = pneg %p115
        $region46: #{conv2d_1x1_batchnorm.1} parent=35 // pred_check_branch
          %254 = sbr.rel (%p252) target = $region48
        $region47: #{conv2d_1x1_batchnorm.1} parent=35 // pred_region
          %255 = dma.done %s248, 144
        $region48: #{conv2d_1x1_batchnorm.1} parent=35 // pred_fallthru
          _
        %p256 = pneg %p37
        %p257 = pneg %p34
        %s258 = sand.u32 %s50, 1
        %s259 = scalar_lea.sflag [#allocation3], %s258
        %s260 = sand.u32 %s50, 1
        %s261 = smul.addr %s260, 1728
        %s262 = scalar_lea.vmem [#allocation2], %s261
        %p263 = pneg %p63
        %p264 = pneg %p60
        %s265 = sand.u32 %s21, 1
        %s266 = scalar_lea.sflag [#allocation5], %s265
        %s267 = sand.u32 %s76, 1
        %s268 = smul.addr %s267, 9
        %s269 = scalar_lea.vmem [#allocation4], %s268
        %p270 = pneg %p89
        %p271 = pneg %p86
        %s272 = sand.u32 %s21, 1
        %s273 = scalar_lea.sflag [#allocation5], %s272
        %s274 = sand.u32 %s102, 1
        %s275 = smul.addr %s274, 9
        %s276 = scalar_lea.vmem [#allocation6], %s275
        %p277 = pneg %p115
        %p278 = pneg %p112
        %p279 = pneg %p141
        %p280 = pneg %p138
        %s281 = sand.u32 %s128, 1
        %s282 = sand.u32 %s128, 1
        %s283 = smul.addr %s282, 504
        %s284 = scalar_lea.vmem [#allocation7], %s283
        %s285 = smul.u32 9, %s21
        %s286 = smul.u32 9, %s21
        %s287 = smul.u32 9, %s21
        %s288 = smul.u32 9, %s21
        %v290 = vld [vmem:[%s0] sm:$0xff]
        %v291 = vld [vmem:[%s0 + $0x8] sm:$0xf]
        %v292 = vld [vmem:[%s0 + $0xc] sm:$0xff]
        %v293 = vld [vmem:[%s0 + $0x14] sm:$0xf]
        %v294 = vld [vmem:[%s0 + $0x18] sm:$0xff]
        %v295 = vld [vmem:[%s0 + $0x20] sm:$0xf]
        %v296 = vld [vmem:[%s0 + $0x24] sm:$0xff]
        %v297 = vld [vmem:[%s0 + $0x2c] sm:$0xf]
        %v298 = vld [vmem:[%s0 + $0x30] sm:$0xff]
        %v299 = vld [vmem:[%s0 + $0x38] sm:$0xf]
        %v300 = vld [vmem:[%s0 + $0x3c] sm:$0xff]
        %v301 = vld [vmem:[%s0 + $0x44] sm:$0xf]
        %v302 = vld [vmem:[%s0 + $0x48] sm:$0x11]
        %v303 = vld [vmem:[%s0 + $0x50] sm:$0x1]
        %v304 = vld [vmem:[%s233] sm:$0xff]
        %v305 = vld [vmem:[%s233 + $0x8] sm:$0xff]
        %v306 = vld [vmem:[%s233 + $0x10] sm:$0xff]
        %v307 = vld [vmem:[%s233 + $0x18] sm:$0xff]
        %v308 = vld [vmem:[%s233 + $0x20] sm:$0xf]
        %v309 = vld [vmem:[%s233 + $0x24] sm:$0xff]
        %v310 = vld [vmem:[%s233 + $0x2c] sm:$0xff]
        %v311 = vld [vmem:[%s233 + $0x34] sm:$0xff]
        %v312 = vld [vmem:[%s233 + $0x3c] sm:$0xff]
        %v313 = vld [vmem:[%s233 + $0x44] sm:$0xf]
        %v314 = vld [vmem:[%s233 + $0x48] sm:$0xff]
        %v315 = vld [vmem:[%s233 + $0x50] sm:$0xff]
        %v316 = vld [vmem:[%s233 + $0x58] sm:$0xff]
        %v317 = vld [vmem:[%s233 + $0x60] sm:$0xff]
        %v318 = vld [vmem:[%s233 + $0x68] sm:$0xf]
        %v319 = vld [vmem:[%s233 + $0x6c] sm:$0xff]
        %v320 = vld [vmem:[%s233 + $0x74] sm:$0xff]
        %v321 = vld [vmem:[%s233 + $0x7c] sm:$0xff]
        %v322 = vld [vmem:[%s233 + $0x84] sm:$0xff]
        %v323 = vld [vmem:[%s233 + $0x8c] sm:$0xf]
        %v324 = vld [vmem:[%s233 + $0x90] sm:$0xff]
        %v325 = vld [vmem:[%s233 + $0x98] sm:$0xff]
        %v326 = vld [vmem:[%s233 + $0xa0] sm:$0xff]
        %v327 = vld [vmem:[%s233 + $0xa8] sm:$0xff]
        %v328 = vld [vmem:[%s233 + $0xb0] sm:$0xf]
        %v329 = vld [vmem:[%s233 + $0xb4] sm:$0xff]
        %v330 = vld [vmem:[%s233 + $0xbc] sm:$0xff]
        %v331 = vld [vmem:[%s233 + $0xc4] sm:$0xff]
        %v332 = vld [vmem:[%s233 + $0xcc] sm:$0xff]
        %v333 = vld [vmem:[%s233 + $0xd4] sm:$0xf]
        %v334 = vld [vmem:[%s233 + $0xd8] sm:$0xff]
        %v335 = vld [vmem:[%s233 + $0xe0] sm:$0xff]
        %v336 = vld [vmem:[%s233 + $0xe8] sm:$0xff]
        %v337 = vld [vmem:[%s233 + $0xf0] sm:$0xff]
        %v338 = vld [vmem:[%s233 + $0xf8] sm:$0xf]
        %v339 = vld [vmem:[%s233 + $0xfc] sm:$0xff]
        %v340 = vld [vmem:[%s233 + $0x104] sm:$0xff]
        %v341 = vld [vmem:[%s233 + $0x10c] sm:$0xff]
        %v342 = vld [vmem:[%s233 + $0x114] sm:$0xff]
        %v343 = vld [vmem:[%s233 + $0x11c] sm:$0xf]
        %v344 = vld [vmem:[%s233 + $0x120] sm:$0xff]
        %v345 = vld [vmem:[%s233 + $0x128] sm:$0xff]
        %v346 = vld [vmem:[%s233 + $0x130] sm:$0xff]
        %v347 = vld [vmem:[%s233 + $0x138] sm:$0xff]
        %v348 = vld [vmem:[%s233 + $0x140] sm:$0xf]
        %v349 = vld [vmem:[%s233 + $0x144] sm:$0xff]
        %v350 = vld [vmem:[%s233 + $0x14c] sm:$0xff]
        %v351 = vld [vmem:[%s233 + $0x154] sm:$0xff]
        %v352 = vld [vmem:[%s233 + $0x15c] sm:$0xff]
        %v353 = vld [vmem:[%s233 + $0x164] sm:$0xf]
        %v354 = vld [vmem:[%s233 + $0x168] sm:$0xff]
        %v355 = vld [vmem:[%s233 + $0x170] sm:$0xff]
        %v356 = vld [vmem:[%s233 + $0x178] sm:$0xff]
        %v357 = vld [vmem:[%s233 + $0x180] sm:$0xff]
        %v358 = vld [vmem:[%s233 + $0x188] sm:$0xf]
        %v359 = vld [vmem:[%s233 + $0x18c] sm:$0xff]
        %v360 = vld [vmem:[%s233 + $0x194] sm:$0xff]
        %v361 = vld [vmem:[%s233 + $0x19c] sm:$0xff]
        %v362 = vld [vmem:[%s233 + $0x1a4] sm:$0xff]
        %v363 = vld [vmem:[%s233 + $0x1ac] sm:$0xf]
        %v364 = vld [vmem:[%s233 + $0x1b0] sm:$0xff]
        %v365 = vld [vmem:[%s233 + $0x1b8] sm:$0xff]
        %v366 = vld [vmem:[%s233 + $0x1c0] sm:$0xff]
        %v367 = vld [vmem:[%s233 + $0x1c8] sm:$0xff]
        %v368 = vld [vmem:[%s233 + $0x1d0] sm:$0xf]
        %v369 = vld [vmem:[%s233 + $0x1d4] sm:$0xff]
        %v370 = vld [vmem:[%s233 + $0x1dc] sm:$0xff]
        %v371 = vld [vmem:[%s233 + $0x1e4] sm:$0xff]
        %v372 = vld [vmem:[%s233 + $0x1ec] sm:$0xff]
        %v373 = vld [vmem:[%s233 + $0x1f4] sm:$0xf]
        %v374 = vld [vmem:[%s233 + $0x1f8] sm:$0xff]
        %v375 = vld [vmem:[%s233 + $0x200] sm:$0xff]
        %v376 = vld [vmem:[%s233 + $0x208] sm:$0xff]
        %v377 = vld [vmem:[%s233 + $0x210] sm:$0xff]
        %v378 = vld [vmem:[%s233 + $0x218] sm:$0xf]
        %v379 = vld [vmem:[%s233 + $0x21c] sm:$0xff]
        %v380 = vld [vmem:[%s233 + $0x224] sm:$0xff]
        %v381 = vld [vmem:[%s233 + $0x22c] sm:$0xff]
        %v382 = vld [vmem:[%s233 + $0x234] sm:$0xff]
        %v383 = vld [vmem:[%s233 + $0x23c] sm:$0xf]
        %v384 = vld [vmem:[%s233 + $0x240] sm:$0xff]
        %v385 = vld [vmem:[%s233 + $0x248] sm:$0xff]
        %v386 = vld [vmem:[%s233 + $0x250] sm:$0xff]
        %v387 = vld [vmem:[%s233 + $0x258] sm:$0xff]
        %v388 = vld [vmem:[%s233 + $0x260] sm:$0xf]
        %v389 = vld [vmem:[%s233 + $0x264] sm:$0xff]
        %v390 = vld [vmem:[%s233 + $0x26c] sm:$0xff]
        %v391 = vld [vmem:[%s233 + $0x274] sm:$0xff]
        %v392 = vld [vmem:[%s233 + $0x27c] sm:$0xff]
        %v393 = vld [vmem:[%s233 + $0x284] sm:$0xf]
        %v394 = vld [vmem:[%s233 + $0x288] sm:$0xff]
        %v395 = vld [vmem:[%s233 + $0x290] sm:$0xff]
        %v396 = vld [vmem:[%s233 + $0x298] sm:$0xff]
        %v397 = vld [vmem:[%s233 + $0x2a0] sm:$0xff]
        %v398 = vld [vmem:[%s233 + $0x2a8] sm:$0xf]
        %v399 = vld [vmem:[%s233 + $0x2ac] sm:$0xff]
        %v400 = vld [vmem:[%s233 + $0x2b4] sm:$0xff]
        %v401 = vld [vmem:[%s233 + $0x2bc] sm:$0xff]
        %v402 = vld [vmem:[%s233 + $0x2c4] sm:$0xff]
        %v403 = vld [vmem:[%s233 + $0x2cc] sm:$0xf]
        %v404 = vld [vmem:[%s233 + $0x2d0] sm:$0xff]
        %v405 = vld [vmem:[%s233 + $0x2d8] sm:$0xff]
        %v406 = vld [vmem:[%s233 + $0x2e0] sm:$0xff]
        %v407 = vld [vmem:[%s233 + $0x2e8] sm:$0xff]
        %v408 = vld [vmem:[%s233 + $0x2f0] sm:$0xf]
        %v409 = vld [vmem:[%s233 + $0x2f4] sm:$0xff]
        %v410 = vld [vmem:[%s233 + $0x2fc] sm:$0xff]
        %v411 = vld [vmem:[%s233 + $0x304] sm:$0xff]
        %v412 = vld [vmem:[%s233 + $0x30c] sm:$0xff]
        %v413 = vld [vmem:[%s233 + $0x314] sm:$0xf]
        %v414 = vld [vmem:[%s233 + $0x318] sm:$0xff]
        %v415 = vld [vmem:[%s233 + $0x320] sm:$0xff]
        %v416 = vld [vmem:[%s233 + $0x328] sm:$0xff]
        %v417 = vld [vmem:[%s233 + $0x330] sm:$0xff]
        %v418 = vld [vmem:[%s233 + $0x338] sm:$0xf]
        %v419 = vld [vmem:[%s233 + $0x33c] sm:$0xff]
        %v420 = vld [vmem:[%s233 + $0x344] sm:$0xff]
        %v421 = vld [vmem:[%s233 + $0x34c] sm:$0xff]
        %v422 = vld [vmem:[%s233 + $0x354] sm:$0xff]
        %v423 = vld [vmem:[%s233 + $0x35c] sm:$0xf]
        %v424 = vld [vmem:[%s233 + $0x360] sm:$0xff]
        %v425 = vld [vmem:[%s233 + $0x368] sm:$0xff]
        %v426 = vld [vmem:[%s233 + $0x370] sm:$0xff]
        %v427 = vld [vmem:[%s233 + $0x378] sm:$0xff]
        %v428 = vld [vmem:[%s233 + $0x380] sm:$0xf]
        %v429 = vld [vmem:[%s233 + $0x384] sm:$0xff]
        %v430 = vld [vmem:[%s233 + $0x38c] sm:$0xff]
        %v431 = vld [vmem:[%s233 + $0x394] sm:$0xff]
        %v432 = vld [vmem:[%s233 + $0x39c] sm:$0xff]
        %v433 = vld [vmem:[%s233 + $0x3a4] sm:$0xf]
        %v434 = vld [vmem:[%s233 + $0x3a8] sm:$0xff]
        %v435 = vld [vmem:[%s233 + $0x3b0] sm:$0xff]
        %v436 = vld [vmem:[%s233 + $0x3b8] sm:$0xff]
        %v437 = vld [vmem:[%s233 + $0x3c0] sm:$0xff]
        %v438 = vld [vmem:[%s233 + $0x3c8] sm:$0xf]
        %v439 = vld [vmem:[%s233 + $0x3cc] sm:$0xff]
        %v440 = vld [vmem:[%s233 + $0x3d4] sm:$0xff]
        %v441 = vld [vmem:[%s233 + $0x3dc] sm:$0xff]
        %v442 = vld [vmem:[%s233 + $0x3e4] sm:$0xff]
        %v443 = vld [vmem:[%s233 + $0x3ec] sm:$0xf]
        %v444 = vld [vmem:[%s233 + $0x3f0] sm:$0xff]
        %v445 = vld [vmem:[%s233 + $0x3f8] sm:$0xff]
        %v446 = vld [vmem:[%s233 + $0x400] sm:$0xff]
        %v447 = vld [vmem:[%s233 + $0x408] sm:$0xff]
        %v448 = vld [vmem:[%s233 + $0x410] sm:$0xf]
        %v449 = vld [vmem:[%s233 + $0x414] sm:$0xff]
        %v450 = vld [vmem:[%s233 + $0x41c] sm:$0xff]
        %v451 = vld [vmem:[%s233 + $0x424] sm:$0xff]
        %v452 = vld [vmem:[%s233 + $0x42c] sm:$0xff]
        %v453 = vld [vmem:[%s233 + $0x434] sm:$0xf]
        %v454 = vld [vmem:[%s233 + $0x438] sm:$0xff]
        %v455 = vld [vmem:[%s233 + $0x440] sm:$0xff]
        %v456 = vld [vmem:[%s233 + $0x448] sm:$0xff]
        %v457 = vld [vmem:[%s233 + $0x450] sm:$0xff]
        %v458 = vld [vmem:[%s233 + $0x458] sm:$0xf]
        %v459 = vld [vmem:[%s233 + $0x45c] sm:$0xff]
        %v460 = vld [vmem:[%s233 + $0x464] sm:$0xff]
        %v461 = vld [vmem:[%s233 + $0x46c] sm:$0xff]
        %v462 = vld [vmem:[%s233 + $0x474] sm:$0xff]
        %v463 = vld [vmem:[%s233 + $0x47c] sm:$0xf]
        %v464 = vld [vmem:[%s233 + $0x480] sm:$0xff]
        %v465 = vld [vmem:[%s233 + $0x488] sm:$0xff]
        %v466 = vld [vmem:[%s233 + $0x490] sm:$0xff]
        %v467 = vld [vmem:[%s233 + $0x498] sm:$0xff]
        %v468 = vld [vmem:[%s233 + $0x4a0] sm:$0xf]
        %v469 = vld [vmem:[%s233 + $0x4a4] sm:$0xff]
        %v470 = vld [vmem:[%s233 + $0x4ac] sm:$0xff]
        %v471 = vld [vmem:[%s233 + $0x4b4] sm:$0xff]
        %v472 = vld [vmem:[%s233 + $0x4bc] sm:$0xff]
        %v473 = vld [vmem:[%s233 + $0x4c4] sm:$0xf]
        %v474 = vld [vmem:[%s233 + $0x4c8] sm:$0xff]
        %v475 = vld [vmem:[%s233 + $0x4d0] sm:$0xff]
        %v476 = vld [vmem:[%s233 + $0x4d8] sm:$0xff]
        %v477 = vld [vmem:[%s233 + $0x4e0] sm:$0xff]
        %v478 = vld [vmem:[%s233 + $0x4e8] sm:$0xf]
        %v479 = vld [vmem:[%s233 + $0x4ec] sm:$0xff]
        %v480 = vld [vmem:[%s233 + $0x4f4] sm:$0xff]
        %v481 = vld [vmem:[%s233 + $0x4fc] sm:$0xff]
        %v482 = vld [vmem:[%s233 + $0x504] sm:$0xff]
        %v483 = vld [vmem:[%s233 + $0x50c] sm:$0xf]
        %v484 = vld [vmem:[%s233 + $0x510] sm:$0xff]
        %v485 = vld [vmem:[%s233 + $0x518] sm:$0xff]
        %v486 = vld [vmem:[%s233 + $0x520] sm:$0xff]
        %v487 = vld [vmem:[%s233 + $0x528] sm:$0xff]
        %v488 = vld [vmem:[%s233 + $0x530] sm:$0xf]
        %v489 = vld [vmem:[%s233 + $0x534] sm:$0xff]
        %v490 = vld [vmem:[%s233 + $0x53c] sm:$0xff]
        %v491 = vld [vmem:[%s233 + $0x544] sm:$0xff]
        %v492 = vld [vmem:[%s233 + $0x54c] sm:$0xff]
        %v493 = vld [vmem:[%s233 + $0x554] sm:$0xf]
        %v494 = vld [vmem:[%s233 + $0x558] sm:$0xff]
        %v495 = vld [vmem:[%s233 + $0x560] sm:$0xff]
        %v496 = vld [vmem:[%s233 + $0x568] sm:$0xff]
        %v497 = vld [vmem:[%s233 + $0x570] sm:$0xff]
        %v498 = vld [vmem:[%s233 + $0x578] sm:$0xf]
        %v499 = vld [vmem:[%s233 + $0x57c] sm:$0xff]
        %v500 = vld [vmem:[%s233 + $0x584] sm:$0xff]
        %v501 = vld [vmem:[%s233 + $0x58c] sm:$0xff]
        %v502 = vld [vmem:[%s233 + $0x594] sm:$0xff]
        %v503 = vld [vmem:[%s233 + $0x59c] sm:$0xf]
        %v504 = vld [vmem:[%s233 + $0x5a0] sm:$0xff]
        %v505 = vld [vmem:[%s233 + $0x5a8] sm:$0xff]
        %v506 = vld [vmem:[%s233 + $0x5b0] sm:$0xff]
        %v507 = vld [vmem:[%s233 + $0x5b8] sm:$0xff]
        %v508 = vld [vmem:[%s233 + $0x5c0] sm:$0xf]
        %v509 = vld [vmem:[%s233 + $0x5c4] sm:$0xff]
        %v510 = vld [vmem:[%s233 + $0x5cc] sm:$0xff]
        %v511 = vld [vmem:[%s233 + $0x5d4] sm:$0xff]
        %v512 = vld [vmem:[%s233 + $0x5dc] sm:$0xff]
        %v513 = vld [vmem:[%s233 + $0x5e4] sm:$0xf]
        %v514 = vld [vmem:[%s233 + $0x5e8] sm:$0xff]
        %v515 = vld [vmem:[%s233 + $0x5f0] sm:$0xff]
        %v516 = vld [vmem:[%s233 + $0x5f8] sm:$0xff]
        %v517 = vld [vmem:[%s233 + $0x600] sm:$0xff]
        %v518 = vld [vmem:[%s233 + $0x608] sm:$0xf]
        %v519 = vld [vmem:[%s233 + $0x60c] sm:$0xff]
        %v520 = vld [vmem:[%s233 + $0x614] sm:$0xff]
        %v521 = vld [vmem:[%s233 + $0x61c] sm:$0xff]
        %v522 = vld [vmem:[%s233 + $0x624] sm:$0xff]
        %v523 = vld [vmem:[%s233 + $0x62c] sm:$0xf]
        %v524 = vld [vmem:[%s233 + $0x630] sm:$0xff]
        %v525 = vld [vmem:[%s233 + $0x638] sm:$0xff]
        %v526 = vld [vmem:[%s233 + $0x640] sm:$0xff]
        %v527 = vld [vmem:[%s233 + $0x648] sm:$0xff]
        %v528 = vld [vmem:[%s233 + $0x650] sm:$0xf]
        %v529 = vld [vmem:[%s233 + $0x654] sm:$0xff]
        %v530 = vld [vmem:[%s233 + $0x65c] sm:$0xff]
        %v531 = vld [vmem:[%s233 + $0x664] sm:$0xff]
        %v532 = vld [vmem:[%s233 + $0x66c] sm:$0xff]
        %v533 = vld [vmem:[%s233 + $0x674] sm:$0xf]
        %v534 = vld [vmem:[%s233 + $0x678] sm:$0xff]
        %v535 = vld [vmem:[%s233 + $0x680] sm:$0xff]
        %v536 = vld [vmem:[%s233 + $0x688] sm:$0xff]
        %v537 = vld [vmem:[%s233 + $0x690] sm:$0xff]
        %v538 = vld [vmem:[%s233 + $0x698] sm:$0xf]
        %v539 = vld [vmem:[%s233 + $0x69c] sm:$0xff]
        %v540 = vld [vmem:[%s233 + $0x6a4] sm:$0xff]
        %v541 = vld [vmem:[%s233 + $0x6ac] sm:$0xff]
        %v542 = vld [vmem:[%s233 + $0x6b4] sm:$0xff]
        %v543 = vld [vmem:[%s233 + $0x6bc] sm:$0xf]
        %v558 = vunpack.c.l.b16 %v290
        %v559 = vunpack.c.h.b16 %v290
        %v560 = vunpack.c.l.b16 %v291
        %v561 = vunpack.c.l.b16 %v292
        %v562 = vunpack.c.h.b16 %v292
        %v563 = vunpack.c.l.b16 %v293
        %v564 = vunpack.c.l.b16 %v294
        %v565 = vunpack.c.h.b16 %v294
        %v566 = vunpack.c.l.b16 %v295
        %v567 = vunpack.c.l.b16 %v296
        %v568 = vunpack.c.h.b16 %v296
        %v569 = vunpack.c.l.b16 %v297
        %v570 = vunpack.c.l.b16 %v298
        %v571 = vunpack.c.h.b16 %v298
        %v572 = vunpack.c.l.b16 %v299
        %v573 = vunpack.c.l.b16 %v300
        %v574 = vunpack.c.h.b16 %v300
        %v575 = vunpack.c.l.b16 %v301
        %v576 = vunpack.c.l.b16 %v302
        %v577 = vunpack.c.h.b16 %v302
        %v578 = vunpack.c.l.b16 %v303
        %v579 = vpack.c.b16 %v561, %v558
        %v580 = vpack.c.b16 %v562, %v559
        %v581 = vpack.c.b16 %v563, %v560
        %v582 = vpack.c.b16 %v567, %v564
        %v583 = vpack.c.b16 %v568, %v565
        %v584 = vpack.c.b16 %v569, %v566
        %v585 = vpack.c.b16 %v573, %v570
        %v586 = vpack.c.b16 %v574, %v571
        %v587 = vpack.c.b16 %v575, %v572
        %v588 = vpack.c.b16 %v576, %v576
        %v589 = vpack.c.b16 %v577, %v577
        %v590 = vpack.c.b16 %v578, %v578
        %v843 = vunpack.c.l.b16 %v304
        %v844 = vunpack.c.h.b16 %v304
        %v845 = vunpack.c.l.b16 %v305
        %v846 = vunpack.c.h.b16 %v305
        %v847 = vunpack.c.l.b16 %v306
        %v848 = vunpack.c.h.b16 %v306
        %v849 = vunpack.c.l.b16 %v307
        %v850 = vunpack.c.h.b16 %v307
        %v851 = vunpack.c.l.b16 %v308
        %v852 = vunpack.c.l.b16 %v309
        %v853 = vunpack.c.h.b16 %v309
        %v854 = vunpack.c.l.b16 %v310
        %v855 = vunpack.c.h.b16 %v310
        %v856 = vunpack.c.l.b16 %v311
        %v857 = vunpack.c.h.b16 %v311
        %v858 = vunpack.c.l.b16 %v312
        %v859 = vunpack.c.h.b16 %v312
        %v860 = vunpack.c.l.b16 %v313
        %v861 = vunpack.c.l.b16 %v314
        %v862 = vunpack.c.h.b16 %v314
        %v863 = vunpack.c.l.b16 %v315
        %v864 = vunpack.c.h.b16 %v315
        %v865 = vunpack.c.l.b16 %v316
        %v866 = vunpack.c.h.b16 %v316
        %v867 = vunpack.c.l.b16 %v317
        %v868 = vunpack.c.h.b16 %v317
        %v869 = vunpack.c.l.b16 %v318
        %v870 = vunpack.c.l.b16 %v319
        %v871 = vunpack.c.h.b16 %v319
        %v872 = vunpack.c.l.b16 %v320
        %v873 = vunpack.c.h.b16 %v320
        %v874 = vunpack.c.l.b16 %v321
        %v875 = vunpack.c.h.b16 %v321
        %v876 = vunpack.c.l.b16 %v322
        %v877 = vunpack.c.h.b16 %v322
        %v878 = vunpack.c.l.b16 %v323
        %v879 = vunpack.c.l.b16 %v324
        %v880 = vunpack.c.h.b16 %v324
        %v881 = vunpack.c.l.b16 %v325
        %v882 = vunpack.c.h.b16 %v325
        %v883 = vunpack.c.l.b16 %v326
        %v884 = vunpack.c.h.b16 %v326
        %v885 = vunpack.c.l.b16 %v327
        %v886 = vunpack.c.h.b16 %v327
        %v887 = vunpack.c.l.b16 %v328
        %v888 = vunpack.c.l.b16 %v329
        %v889 = vunpack.c.h.b16 %v329
        %v890 = vunpack.c.l.b16 %v330
        %v891 = vunpack.c.h.b16 %v330
        %v892 = vunpack.c.l.b16 %v331
        %v893 = vunpack.c.h.b16 %v331
        %v894 = vunpack.c.l.b16 %v332
        %v895 = vunpack.c.h.b16 %v332
        %v896 = vunpack.c.l.b16 %v333
        %v897 = vunpack.c.l.b16 %v334
        %v898 = vunpack.c.h.b16 %v334
        %v899 = vunpack.c.l.b16 %v335
        %v900 = vunpack.c.h.b16 %v335
        %v901 = vunpack.c.l.b16 %v336
        %v902 = vunpack.c.h.b16 %v336
        %v903 = vunpack.c.l.b16 %v337
        %v904 = vunpack.c.h.b16 %v337
        %v905 = vunpack.c.l.b16 %v338
        %v906 = vunpack.c.l.b16 %v339
        %v907 = vunpack.c.h.b16 %v339
        %v908 = vunpack.c.l.b16 %v340
        %v909 = vunpack.c.h.b16 %v340
        %v910 = vunpack.c.l.b16 %v341
        %v911 = vunpack.c.h.b16 %v341
        %v912 = vunpack.c.l.b16 %v342
        %v913 = vunpack.c.h.b16 %v342
        %v914 = vunpack.c.l.b16 %v343
        %v915 = vunpack.c.l.b16 %v344
        %v916 = vunpack.c.h.b16 %v344
        %v917 = vunpack.c.l.b16 %v345
        %v918 = vunpack.c.h.b16 %v345
        %v919 = vunpack.c.l.b16 %v346
        %v920 = vunpack.c.h.b16 %v346
        %v921 = vunpack.c.l.b16 %v347
        %v922 = vunpack.c.h.b16 %v347
        %v923 = vunpack.c.l.b16 %v348
        %v924 = vunpack.c.l.b16 %v349
        %v925 = vunpack.c.h.b16 %v349
        %v926 = vunpack.c.l.b16 %v350
        %v927 = vunpack.c.h.b16 %v350
        %v928 = vunpack.c.l.b16 %v351
        %v929 = vunpack.c.h.b16 %v351
        %v930 = vunpack.c.l.b16 %v352
        %v931 = vunpack.c.h.b16 %v352
        %v932 = vunpack.c.l.b16 %v353
        %v933 = vunpack.c.l.b16 %v354
        %v934 = vunpack.c.h.b16 %v354
        %v935 = vunpack.c.l.b16 %v355
        %v936 = vunpack.c.h.b16 %v355
        %v937 = vunpack.c.l.b16 %v356
        %v938 = vunpack.c.h.b16 %v356
        %v939 = vunpack.c.l.b16 %v357
        %v940 = vunpack.c.h.b16 %v357
        %v941 = vunpack.c.l.b16 %v358
        %v942 = vunpack.c.l.b16 %v359
        %v943 = vunpack.c.h.b16 %v359
        %v944 = vunpack.c.l.b16 %v360
        %v945 = vunpack.c.h.b16 %v360
        %v946 = vunpack.c.l.b16 %v361
        %v947 = vunpack.c.h.b16 %v361
        %v948 = vunpack.c.l.b16 %v362
        %v949 = vunpack.c.h.b16 %v362
        %v950 = vunpack.c.l.b16 %v363
        %v951 = vunpack.c.l.b16 %v364
        %v952 = vunpack.c.h.b16 %v364
        %v953 = vunpack.c.l.b16 %v365
        %v954 = vunpack.c.h.b16 %v365
        %v955 = vunpack.c.l.b16 %v366
        %v956 = vunpack.c.h.b16 %v366
        %v957 = vunpack.c.l.b16 %v367
        %v958 = vunpack.c.h.b16 %v367
        %v959 = vunpack.c.l.b16 %v368
        %v960 = vunpack.c.l.b16 %v369
        %v961 = vunpack.c.h.b16 %v369
        %v962 = vunpack.c.l.b16 %v370
        %v963 = vunpack.c.h.b16 %v370
        %v964 = vunpack.c.l.b16 %v371
        %v965 = vunpack.c.h.b16 %v371
        %v966 = vunpack.c.l.b16 %v372
        %v967 = vunpack.c.h.b16 %v372
        %v968 = vunpack.c.l.b16 %v373
        %v969 = vunpack.c.l.b16 %v374
        %v970 = vunpack.c.h.b16 %v374
        %v971 = vunpack.c.l.b16 %v375
        %v972 = vunpack.c.h.b16 %v375
        %v973 = vunpack.c.l.b16 %v376
        %v974 = vunpack.c.h.b16 %v376
        %v975 = vunpack.c.l.b16 %v377
        %v976 = vunpack.c.h.b16 %v377
        %v977 = vunpack.c.l.b16 %v378
        %v978 = vunpack.c.l.b16 %v379
        %v979 = vunpack.c.h.b16 %v379
        %v980 = vunpack.c.l.b16 %v380
        %v981 = vunpack.c.h.b16 %v380
        %v982 = vunpack.c.l.b16 %v381
        %v983 = vunpack.c.h.b16 %v381
        %v984 = vunpack.c.l.b16 %v382
        %v985 = vunpack.c.h.b16 %v382
        %v986 = vunpack.c.l.b16 %v383
        %v987 = vunpack.c.l.b16 %v384
        %v988 = vunpack.c.h.b16 %v384
        %v989 = vunpack.c.l.b16 %v385
        %v990 = vunpack.c.h.b16 %v385
        %v991 = vunpack.c.l.b16 %v386
        %v992 = vunpack.c.h.b16 %v386
        %v993 = vunpack.c.l.b16 %v387
        %v994 = vunpack.c.h.b16 %v387
        %v995 = vunpack.c.l.b16 %v388
        %v996 = vunpack.c.l.b16 %v389
        %v997 = vunpack.c.h.b16 %v389
        %v998 = vunpack.c.l.b16 %v390
        %v999 = vunpack.c.h.b16 %v390
        %v1000 = vunpack.c.l.b16 %v391
        %v1001 = vunpack.c.h.b16 %v391
        %v1002 = vunpack.c.l.b16 %v392
        %v1003 = vunpack.c.h.b16 %v392
        %v1004 = vunpack.c.l.b16 %v393
        %v1005 = vunpack.c.l.b16 %v394
        %v1006 = vunpack.c.h.b16 %v394
        %v1007 = vunpack.c.l.b16 %v395
        %v1008 = vunpack.c.h.b16 %v395
        %v1009 = vunpack.c.l.b16 %v396
        %v1010 = vunpack.c.h.b16 %v396
        %v1011 = vunpack.c.l.b16 %v397
        %v1012 = vunpack.c.h.b16 %v397
        %v1013 = vunpack.c.l.b16 %v398
        %v1014 = vunpack.c.l.b16 %v399
        %v1015 = vunpack.c.h.b16 %v399
        %v1016 = vunpack.c.l.b16 %v400
        %v1017 = vunpack.c.h.b16 %v400
        %v1018 = vunpack.c.l.b16 %v401
        %v1019 = vunpack.c.h.b16 %v401
        %v1020 = vunpack.c.l.b16 %v402
        %v1021 = vunpack.c.h.b16 %v402
        %v1022 = vunpack.c.l.b16 %v403
        %v1023 = vunpack.c.l.b16 %v404
        %v1024 = vunpack.c.h.b16 %v404
        %v1025 = vunpack.c.l.b16 %v405
        %v1026 = vunpack.c.h.b16 %v405
        %v1027 = vunpack.c.l.b16 %v406
        %v1028 = vunpack.c.h.b16 %v406
        %v1029 = vunpack.c.l.b16 %v407
        %v1030 = vunpack.c.h.b16 %v407
        %v1031 = vunpack.c.l.b16 %v408
        %v1032 = vunpack.c.l.b16 %v409
        %v1033 = vunpack.c.h.b16 %v409
        %v1034 = vunpack.c.l.b16 %v410
        %v1035 = vunpack.c.h.b16 %v410
        %v1036 = vunpack.c.l.b16 %v411
        %v1037 = vunpack.c.h.b16 %v411
        %v1038 = vunpack.c.l.b16 %v412
        %v1039 = vunpack.c.h.b16 %v412
        %v1040 = vunpack.c.l.b16 %v413
        %v1041 = vunpack.c.l.b16 %v414
        %v1042 = vunpack.c.h.b16 %v414
        %v1043 = vunpack.c.l.b16 %v415
        %v1044 = vunpack.c.h.b16 %v415
        %v1045 = vunpack.c.l.b16 %v416
        %v1046 = vunpack.c.h.b16 %v416
        %v1047 = vunpack.c.l.b16 %v417
        %v1048 = vunpack.c.h.b16 %v417
        %v1049 = vunpack.c.l.b16 %v418
        %v1050 = vunpack.c.l.b16 %v419
        %v1051 = vunpack.c.h.b16 %v419
        %v1052 = vunpack.c.l.b16 %v420
        %v1053 = vunpack.c.h.b16 %v420
        %v1054 = vunpack.c.l.b16 %v421
        %v1055 = vunpack.c.h.b16 %v421
        %v1056 = vunpack.c.l.b16 %v422
        %v1057 = vunpack.c.h.b16 %v422
        %v1058 = vunpack.c.l.b16 %v423
        %v1059 = vunpack.c.l.b16 %v424
        %v1060 = vunpack.c.h.b16 %v424
        %v1061 = vunpack.c.l.b16 %v425
        %v1062 = vunpack.c.h.b16 %v425
        %v1063 = vunpack.c.l.b16 %v426
        %v1064 = vunpack.c.h.b16 %v426
        %v1065 = vunpack.c.l.b16 %v427
        %v1066 = vunpack.c.h.b16 %v427
        %v1067 = vunpack.c.l.b16 %v428
        %v1068 = vunpack.c.l.b16 %v429
        %v1069 = vunpack.c.h.b16 %v429
        %v1070 = vunpack.c.l.b16 %v430
        %v1071 = vunpack.c.h.b16 %v430
        %v1072 = vunpack.c.l.b16 %v431
        %v1073 = vunpack.c.h.b16 %v431
        %v1074 = vunpack.c.l.b16 %v432
        %v1075 = vunpack.c.h.b16 %v432
        %v1076 = vunpack.c.l.b16 %v433
        %v1077 = vunpack.c.l.b16 %v434
        %v1078 = vunpack.c.h.b16 %v434
        %v1079 = vunpack.c.l.b16 %v435
        %v1080 = vunpack.c.h.b16 %v435
        %v1081 = vunpack.c.l.b16 %v436
        %v1082 = vunpack.c.h.b16 %v436
        %v1083 = vunpack.c.l.b16 %v437
        %v1084 = vunpack.c.h.b16 %v437
        %v1085 = vunpack.c.l.b16 %v438
        %v1086 = vunpack.c.l.b16 %v439
        %v1087 = vunpack.c.h.b16 %v439
        %v1088 = vunpack.c.l.b16 %v440
        %v1089 = vunpack.c.h.b16 %v440
        %v1090 = vunpack.c.l.b16 %v441
        %v1091 = vunpack.c.h.b16 %v441
        %v1092 = vunpack.c.l.b16 %v442
        %v1093 = vunpack.c.h.b16 %v442
        %v1094 = vunpack.c.l.b16 %v443
        %v1095 = vunpack.c.l.b16 %v444
        %v1096 = vunpack.c.h.b16 %v444
        %v1097 = vunpack.c.l.b16 %v445
        %v1098 = vunpack.c.h.b16 %v445
        %v1099 = vunpack.c.l.b16 %v446
        %v1100 = vunpack.c.h.b16 %v446
        %v1101 = vunpack.c.l.b16 %v447
        %v1102 = vunpack.c.h.b16 %v447
        %v1103 = vunpack.c.l.b16 %v448
        %v1104 = vunpack.c.l.b16 %v449
        %v1105 = vunpack.c.h.b16 %v449
        %v1106 = vunpack.c.l.b16 %v450
        %v1107 = vunpack.c.h.b16 %v450
        %v1108 = vunpack.c.l.b16 %v451
        %v1109 = vunpack.c.h.b16 %v451
        %v1110 = vunpack.c.l.b16 %v452
        %v1111 = vunpack.c.h.b16 %v452
        %v1112 = vunpack.c.l.b16 %v453
        %v1113 = vunpack.c.l.b16 %v454
        %v1114 = vunpack.c.h.b16 %v454
        %v1115 = vunpack.c.l.b16 %v455
        %v1116 = vunpack.c.h.b16 %v455
        %v1117 = vunpack.c.l.b16 %v456
        %v1118 = vunpack.c.h.b16 %v456
        %v1119 = vunpack.c.l.b16 %v457
        %v1120 = vunpack.c.h.b16 %v457
        %v1121 = vunpack.c.l.b16 %v458
        %v1122 = vunpack.c.l.b16 %v459
        %v1123 = vunpack.c.h.b16 %v459
        %v1124 = vunpack.c.l.b16 %v460
        %v1125 = vunpack.c.h.b16 %v460
        %v1126 = vunpack.c.l.b16 %v461
        %v1127 = vunpack.c.h.b16 %v461
        %v1128 = vunpack.c.l.b16 %v462
        %v1129 = vunpack.c.h.b16 %v462
        %v1130 = vunpack.c.l.b16 %v463
        %v1131 = vunpack.c.l.b16 %v464
        %v1132 = vunpack.c.h.b16 %v464
        %v1133 = vunpack.c.l.b16 %v465
        %v1134 = vunpack.c.h.b16 %v465
        %v1135 = vunpack.c.l.b16 %v466
        %v1136 = vunpack.c.h.b16 %v466
        %v1137 = vunpack.c.l.b16 %v467
        %v1138 = vunpack.c.h.b16 %v467
        %v1139 = vunpack.c.l.b16 %v468
        %v1140 = vunpack.c.l.b16 %v469
        %v1141 = vunpack.c.h.b16 %v469
        %v1142 = vunpack.c.l.b16 %v470
        %v1143 = vunpack.c.h.b16 %v470
        %v1144 = vunpack.c.l.b16 %v471
        %v1145 = vunpack.c.h.b16 %v471
        %v1146 = vunpack.c.l.b16 %v472
        %v1147 = vunpack.c.h.b16 %v472
        %v1148 = vunpack.c.l.b16 %v473
        %v1149 = vunpack.c.l.b16 %v474
        %v1150 = vunpack.c.h.b16 %v474
        %v1151 = vunpack.c.l.b16 %v475
        %v1152 = vunpack.c.h.b16 %v475
        %v1153 = vunpack.c.l.b16 %v476
        %v1154 = vunpack.c.h.b16 %v476
        %v1155 = vunpack.c.l.b16 %v477
        %v1156 = vunpack.c.h.b16 %v477
        %v1157 = vunpack.c.l.b16 %v478
        %v1158 = vunpack.c.l.b16 %v479
        %v1159 = vunpack.c.h.b16 %v479
        %v1160 = vunpack.c.l.b16 %v480
        %v1161 = vunpack.c.h.b16 %v480
        %v1162 = vunpack.c.l.b16 %v481
        %v1163 = vunpack.c.h.b16 %v481
        %v1164 = vunpack.c.l.b16 %v482
        %v1165 = vunpack.c.h.b16 %v482
        %v1166 = vunpack.c.l.b16 %v483
        %v1167 = vunpack.c.l.b16 %v484
        %v1168 = vunpack.c.h.b16 %v484
        %v1169 = vunpack.c.l.b16 %v485
        %v1170 = vunpack.c.h.b16 %v485
        %v1171 = vunpack.c.l.b16 %v486
        %v1172 = vunpack.c.h.b16 %v486
        %v1173 = vunpack.c.l.b16 %v487
        %v1174 = vunpack.c.h.b16 %v487
        %v1175 = vunpack.c.l.b16 %v488
        %v1176 = vunpack.c.l.b16 %v489
        %v1177 = vunpack.c.h.b16 %v489
        %v1178 = vunpack.c.l.b16 %v490
        %v1179 = vunpack.c.h.b16 %v490
        %v1180 = vunpack.c.l.b16 %v491
        %v1181 = vunpack.c.h.b16 %v491
        %v1182 = vunpack.c.l.b16 %v492
        %v1183 = vunpack.c.h.b16 %v492
        %v1184 = vunpack.c.l.b16 %v493
        %v1185 = vunpack.c.l.b16 %v494
        %v1186 = vunpack.c.h.b16 %v494
        %v1187 = vunpack.c.l.b16 %v495
        %v1188 = vunpack.c.h.b16 %v495
        %v1189 = vunpack.c.l.b16 %v496
        %v1190 = vunpack.c.h.b16 %v496
        %v1191 = vunpack.c.l.b16 %v497
        %v1192 = vunpack.c.h.b16 %v497
        %v1193 = vunpack.c.l.b16 %v498
        %v1194 = vunpack.c.l.b16 %v499
        %v1195 = vunpack.c.h.b16 %v499
        %v1196 = vunpack.c.l.b16 %v500
        %v1197 = vunpack.c.h.b16 %v500
        %v1198 = vunpack.c.l.b16 %v501
        %v1199 = vunpack.c.h.b16 %v501
        %v1200 = vunpack.c.l.b16 %v502
        %v1201 = vunpack.c.h.b16 %v502
        %v1202 = vunpack.c.l.b16 %v503
        %v1203 = vunpack.c.l.b16 %v504
        %v1204 = vunpack.c.h.b16 %v504
        %v1205 = vunpack.c.l.b16 %v505
        %v1206 = vunpack.c.h.b16 %v505
        %v1207 = vunpack.c.l.b16 %v506
        %v1208 = vunpack.c.h.b16 %v506
        %v1209 = vunpack.c.l.b16 %v507
        %v1210 = vunpack.c.h.b16 %v507
        %v1211 = vunpack.c.l.b16 %v508
        %v1212 = vunpack.c.l.b16 %v509
        %v1213 = vunpack.c.h.b16 %v509
        %v1214 = vunpack.c.l.b16 %v510
        %v1215 = vunpack.c.h.b16 %v510
        %v1216 = vunpack.c.l.b16 %v511
        %v1217 = vunpack.c.h.b16 %v511
        %v1218 = vunpack.c.l.b16 %v512
        %v1219 = vunpack.c.h.b16 %v512
        %v1220 = vunpack.c.l.b16 %v513
        %v1221 = vunpack.c.l.b16 %v514
        %v1222 = vunpack.c.h.b16 %v514
        %v1223 = vunpack.c.l.b16 %v515
        %v1224 = vunpack.c.h.b16 %v515
        %v1225 = vunpack.c.l.b16 %v516
        %v1226 = vunpack.c.h.b16 %v516
        %v1227 = vunpack.c.l.b16 %v517
        %v1228 = vunpack.c.h.b16 %v517
        %v1229 = vunpack.c.l.b16 %v518
        %v1230 = vunpack.c.l.b16 %v519
        %v1231 = vunpack.c.h.b16 %v519
        %v1232 = vunpack.c.l.b16 %v520
        %v1233 = vunpack.c.h.b16 %v520
        %v1234 = vunpack.c.l.b16 %v521
        %v1235 = vunpack.c.h.b16 %v521
        %v1236 = vunpack.c.l.b16 %v522
        %v1237 = vunpack.c.h.b16 %v522
        %v1238 = vunpack.c.l.b16 %v523
        %v1239 = vunpack.c.l.b16 %v524
        %v1240 = vunpack.c.h.b16 %v524
        %v1241 = vunpack.c.l.b16 %v525
        %v1242 = vunpack.c.h.b16 %v525
        %v1243 = vunpack.c.l.b16 %v526
        %v1244 = vunpack.c.h.b16 %v526
        %v1245 = vunpack.c.l.b16 %v527
        %v1246 = vunpack.c.h.b16 %v527
        %v1247 = vunpack.c.l.b16 %v528
        %v1248 = vunpack.c.l.b16 %v529
        %v1249 = vunpack.c.h.b16 %v529
        %v1250 = vunpack.c.l.b16 %v530
        %v1251 = vunpack.c.h.b16 %v530
        %v1252 = vunpack.c.l.b16 %v531
        %v1253 = vunpack.c.h.b16 %v531
        %v1254 = vunpack.c.l.b16 %v532
        %v1255 = vunpack.c.h.b16 %v532
        %v1256 = vunpack.c.l.b16 %v533
        %v1257 = vunpack.c.l.b16 %v534
        %v1258 = vunpack.c.h.b16 %v534
        %v1259 = vunpack.c.l.b16 %v535
        %v1260 = vunpack.c.h.b16 %v535
        %v1261 = vunpack.c.l.b16 %v536
        %v1262 = vunpack.c.h.b16 %v536
        %v1263 = vunpack.c.l.b16 %v537
        %v1264 = vunpack.c.h.b16 %v537
        %v1265 = vunpack.c.l.b16 %v538
        %v1266 = vunpack.c.l.b16 %v539
        %v1267 = vunpack.c.h.b16 %v539
        %v1268 = vunpack.c.l.b16 %v540
        %v1269 = vunpack.c.h.b16 %v540
        %v1270 = vunpack.c.l.b16 %v541
        %v1271 = vunpack.c.h.b16 %v541
        %v1272 = vunpack.c.l.b16 %v542
        %v1273 = vunpack.c.h.b16 %v542
        %v1274 = vunpack.c.l.b16 %v543
        %v1275 = vpack.c.b16 %v852, %v843
        %v1276 = vpack.c.b16 %v853, %v844
        %v1277 = vpack.c.b16 %v854, %v845
        %v1278 = vpack.c.b16 %v855, %v846
        %v1279 = vpack.c.b16 %v856, %v847
        %v1280 = vpack.c.b16 %v857, %v848
        %v1281 = vpack.c.b16 %v858, %v849
        %v1282 = vpack.c.b16 %v859, %v850
        %v1283 = vpack.c.b16 %v860, %v851
        %v1284 = vpack.c.b16 %v870, %v861
        %v1285 = vpack.c.b16 %v871, %v862
        %v1286 = vpack.c.b16 %v872, %v863
        %v1287 = vpack.c.b16 %v873, %v864
        %v1288 = vpack.c.b16 %v874, %v865
        %v1289 = vpack.c.b16 %v875, %v866
        %v1290 = vpack.c.b16 %v876, %v867
        %v1291 = vpack.c.b16 %v877, %v868
        %v1292 = vpack.c.b16 %v878, %v869
        %v1293 = vpack.c.b16 %v888, %v879
        %v1294 = vpack.c.b16 %v889, %v880
        %v1295 = vpack.c.b16 %v890, %v881
        %v1296 = vpack.c.b16 %v891, %v882
        %v1297 = vpack.c.b16 %v892, %v883
        %v1298 = vpack.c.b16 %v893, %v884
        %v1299 = vpack.c.b16 %v894, %v885
        %v1300 = vpack.c.b16 %v895, %v886
        %v1301 = vpack.c.b16 %v896, %v887
        %v1302 = vpack.c.b16 %v906, %v897
        %v1303 = vpack.c.b16 %v907, %v898
        %v1304 = vpack.c.b16 %v908, %v899
        %v1305 = vpack.c.b16 %v909, %v900
        %v1306 = vpack.c.b16 %v910, %v901
        %v1307 = vpack.c.b16 %v911, %v902
        %v1308 = vpack.c.b16 %v912, %v903
        %v1309 = vpack.c.b16 %v913, %v904
        %v1310 = vpack.c.b16 %v914, %v905
        %v1311 = vpack.c.b16 %v924, %v915
        %v1312 = vpack.c.b16 %v925, %v916
        %v1313 = vpack.c.b16 %v926, %v917
        %v1314 = vpack.c.b16 %v927, %v918
        %v1315 = vpack.c.b16 %v928, %v919
        %v1316 = vpack.c.b16 %v929, %v920
        %v1317 = vpack.c.b16 %v930, %v921
        %v1318 = vpack.c.b16 %v931, %v922
        %v1319 = vpack.c.b16 %v932, %v923
        %v1320 = vpack.c.b16 %v942, %v933
        %v1321 = vpack.c.b16 %v943, %v934
        %v1322 = vpack.c.b16 %v944, %v935
        %v1323 = vpack.c.b16 %v945, %v936
        %v1324 = vpack.c.b16 %v946, %v937
        %v1325 = vpack.c.b16 %v947, %v938
        %v1326 = vpack.c.b16 %v948, %v939
        %v1327 = vpack.c.b16 %v949, %v940
        %v1328 = vpack.c.b16 %v950, %v941
        %v1329 = vpack.c.b16 %v960, %v951
        %v1330 = vpack.c.b16 %v961, %v952
        %v1331 = vpack.c.b16 %v962, %v953
        %v1332 = vpack.c.b16 %v963, %v954
        %v1333 = vpack.c.b16 %v964, %v955
        %v1334 = vpack.c.b16 %v965, %v956
        %v1335 = vpack.c.b16 %v966, %v957
        %v1336 = vpack.c.b16 %v967, %v958
        %v1337 = vpack.c.b16 %v968, %v959
        %v1338 = vpack.c.b16 %v978, %v969
        %v1339 = vpack.c.b16 %v979, %v970
        %v1340 = vpack.c.b16 %v980, %v971
        %v1341 = vpack.c.b16 %v981, %v972
        %v1342 = vpack.c.b16 %v982, %v973
        %v1343 = vpack.c.b16 %v983, %v974
        %v1344 = vpack.c.b16 %v984, %v975
        %v1345 = vpack.c.b16 %v985, %v976
        %v1346 = vpack.c.b16 %v986, %v977
        %v1347 = vpack.c.b16 %v996, %v987
        %v1348 = vpack.c.b16 %v997, %v988
        %v1349 = vpack.c.b16 %v998, %v989
        %v1350 = vpack.c.b16 %v999, %v990
        %v1351 = vpack.c.b16 %v1000, %v991
        %v1352 = vpack.c.b16 %v1001, %v992
        %v1353 = vpack.c.b16 %v1002, %v993
        %v1354 = vpack.c.b16 %v1003, %v994
        %v1355 = vpack.c.b16 %v1004, %v995
        %v1356 = vpack.c.b16 %v1014, %v1005
        %v1357 = vpack.c.b16 %v1015, %v1006
        %v1358 = vpack.c.b16 %v1016, %v1007
        %v1359 = vpack.c.b16 %v1017, %v1008
        %v1360 = vpack.c.b16 %v1018, %v1009
        %v1361 = vpack.c.b16 %v1019, %v1010
        %v1362 = vpack.c.b16 %v1020, %v1011
        %v1363 = vpack.c.b16 %v1021, %v1012
        %v1364 = vpack.c.b16 %v1022, %v1013
        %v1365 = vpack.c.b16 %v1032, %v1023
        %v1366 = vpack.c.b16 %v1033, %v1024
        %v1367 = vpack.c.b16 %v1034, %v1025
        %v1368 = vpack.c.b16 %v1035, %v1026
        %v1369 = vpack.c.b16 %v1036, %v1027
        %v1370 = vpack.c.b16 %v1037, %v1028
        %v1371 = vpack.c.b16 %v1038, %v1029
        %v1372 = vpack.c.b16 %v1039, %v1030
        %v1373 = vpack.c.b16 %v1040, %v1031
        %v1374 = vpack.c.b16 %v1050, %v1041
        %v1375 = vpack.c.b16 %v1051, %v1042
        %v1376 = vpack.c.b16 %v1052, %v1043
        %v1377 = vpack.c.b16 %v1053, %v1044
        %v1378 = vpack.c.b16 %v1054, %v1045
        %v1379 = vpack.c.b16 %v1055, %v1046
        %v1380 = vpack.c.b16 %v1056, %v1047
        %v1381 = vpack.c.b16 %v1057, %v1048
        %v1382 = vpack.c.b16 %v1058, %v1049
        %v1383 = vpack.c.b16 %v1068, %v1059
        %v1384 = vpack.c.b16 %v1069, %v1060
        %v1385 = vpack.c.b16 %v1070, %v1061
        %v1386 = vpack.c.b16 %v1071, %v1062
        %v1387 = vpack.c.b16 %v1072, %v1063
        %v1388 = vpack.c.b16 %v1073, %v1064
        %v1389 = vpack.c.b16 %v1074, %v1065
        %v1390 = vpack.c.b16 %v1075, %v1066
        %v1391 = vpack.c.b16 %v1076, %v1067
        %v1392 = vpack.c.b16 %v1086, %v1077
        %v1393 = vpack.c.b16 %v1087, %v1078
        %v1394 = vpack.c.b16 %v1088, %v1079
        %v1395 = vpack.c.b16 %v1089, %v1080
        %v1396 = vpack.c.b16 %v1090, %v1081
        %v1397 = vpack.c.b16 %v1091, %v1082
        %v1398 = vpack.c.b16 %v1092, %v1083
        %v1399 = vpack.c.b16 %v1093, %v1084
        %v1400 = vpack.c.b16 %v1094, %v1085
        %v1401 = vpack.c.b16 %v1104, %v1095
        %v1402 = vpack.c.b16 %v1105, %v1096
        %v1403 = vpack.c.b16 %v1106, %v1097
        %v1404 = vpack.c.b16 %v1107, %v1098
        %v1405 = vpack.c.b16 %v1108, %v1099
        %v1406 = vpack.c.b16 %v1109, %v1100
        %v1407 = vpack.c.b16 %v1110, %v1101
        %v1408 = vpack.c.b16 %v1111, %v1102
        %v1409 = vpack.c.b16 %v1112, %v1103
        %v1410 = vpack.c.b16 %v1122, %v1113
        %v1411 = vpack.c.b16 %v1123, %v1114
        %v1412 = vpack.c.b16 %v1124, %v1115
        %v1413 = vpack.c.b16 %v1125, %v1116
        %v1414 = vpack.c.b16 %v1126, %v1117
        %v1415 = vpack.c.b16 %v1127, %v1118
        %v1416 = vpack.c.b16 %v1128, %v1119
        %v1417 = vpack.c.b16 %v1129, %v1120
        %v1418 = vpack.c.b16 %v1130, %v1121
        %v1419 = vpack.c.b16 %v1140, %v1131
        %v1420 = vpack.c.b16 %v1141, %v1132
        %v1421 = vpack.c.b16 %v1142, %v1133
        %v1422 = vpack.c.b16 %v1143, %v1134
        %v1423 = vpack.c.b16 %v1144, %v1135
        %v1424 = vpack.c.b16 %v1145, %v1136
        %v1425 = vpack.c.b16 %v1146, %v1137
        %v1426 = vpack.c.b16 %v1147, %v1138
        %v1427 = vpack.c.b16 %v1148, %v1139
        %v1428 = vpack.c.b16 %v1158, %v1149
        %v1429 = vpack.c.b16 %v1159, %v1150
        %v1430 = vpack.c.b16 %v1160, %v1151
        %v1431 = vpack.c.b16 %v1161, %v1152
        %v1432 = vpack.c.b16 %v1162, %v1153
        %v1433 = vpack.c.b16 %v1163, %v1154
        %v1434 = vpack.c.b16 %v1164, %v1155
        %v1435 = vpack.c.b16 %v1165, %v1156
        %v1436 = vpack.c.b16 %v1166, %v1157
        %v1437 = vpack.c.b16 %v1176, %v1167
        %v1438 = vpack.c.b16 %v1177, %v1168
        %v1439 = vpack.c.b16 %v1178, %v1169
        %v1440 = vpack.c.b16 %v1179, %v1170
        %v1441 = vpack.c.b16 %v1180, %v1171
        %v1442 = vpack.c.b16 %v1181, %v1172
        %v1443 = vpack.c.b16 %v1182, %v1173
        %v1444 = vpack.c.b16 %v1183, %v1174
        %v1445 = vpack.c.b16 %v1184, %v1175
        %v1446 = vpack.c.b16 %v1194, %v1185
        %v1447 = vpack.c.b16 %v1195, %v1186
        %v1448 = vpack.c.b16 %v1196, %v1187
        %v1449 = vpack.c.b16 %v1197, %v1188
        %v1450 = vpack.c.b16 %v1198, %v1189
        %v1451 = vpack.c.b16 %v1199, %v1190
        %v1452 = vpack.c.b16 %v1200, %v1191
        %v1453 = vpack.c.b16 %v1201, %v1192
        %v1454 = vpack.c.b16 %v1202, %v1193
        %v1455 = vpack.c.b16 %v1212, %v1203
        %v1456 = vpack.c.b16 %v1213, %v1204
        %v1457 = vpack.c.b16 %v1214, %v1205
        %v1458 = vpack.c.b16 %v1215, %v1206
        %v1459 = vpack.c.b16 %v1216, %v1207
        %v1460 = vpack.c.b16 %v1217, %v1208
        %v1461 = vpack.c.b16 %v1218, %v1209
        %v1462 = vpack.c.b16 %v1219, %v1210
        %v1463 = vpack.c.b16 %v1220, %v1211
        %v1464 = vpack.c.b16 %v1230, %v1221
        %v1465 = vpack.c.b16 %v1231, %v1222
        %v1466 = vpack.c.b16 %v1232, %v1223
        %v1467 = vpack.c.b16 %v1233, %v1224
        %v1468 = vpack.c.b16 %v1234, %v1225
        %v1469 = vpack.c.b16 %v1235, %v1226
        %v1470 = vpack.c.b16 %v1236, %v1227
        %v1471 = vpack.c.b16 %v1237, %v1228
        %v1472 = vpack.c.b16 %v1238, %v1229
        %v1473 = vpack.c.b16 %v1248, %v1239
        %v1474 = vpack.c.b16 %v1249, %v1240
        %v1475 = vpack.c.b16 %v1250, %v1241
        %v1476 = vpack.c.b16 %v1251, %v1242
        %v1477 = vpack.c.b16 %v1252, %v1243
        %v1478 = vpack.c.b16 %v1253, %v1244
        %v1479 = vpack.c.b16 %v1254, %v1245
        %v1480 = vpack.c.b16 %v1255, %v1246
        %v1481 = vpack.c.b16 %v1256, %v1247
        %v1482 = vpack.c.b16 %v1266, %v1257
        %v1483 = vpack.c.b16 %v1267, %v1258
        %v1484 = vpack.c.b16 %v1268, %v1259
        %v1485 = vpack.c.b16 %v1269, %v1260
        %v1486 = vpack.c.b16 %v1270, %v1261
        %v1487 = vpack.c.b16 %v1271, %v1262
        %v1488 = vpack.c.b16 %v1272, %v1263
        %v1489 = vpack.c.b16 %v1273, %v1264
        %v1490 = vpack.c.b16 %v1274, %v1265
        %1707 = vmatprep.subr.bf16.mxu0 %v1276
        %1708 = vmatpush1.bf16.msra.mxu0 %v1275
        %1709 = vmatprep.subr.bf16.mxu0 %v1285
        %1710 = vmatpush1.bf16.msra.mxu0 %v1284
        %1711 = vmatprep.subr.bf16.mxu0 %v1294
        %1712 = vmatpush1.bf16.msra.mxu0 %v1293
        %1713 = vmatprep.subr.bf16.mxu0 %v1303
        %1714 = vmatpush1.bf16.msra.mxu0 %v1302
        %1715 = vmatprep.subr.bf16.mxu0 %v1312
        %1716 = vmatpush1.bf16.msra.mxu0 %v1311
        %1717 = vmatprep.subr.bf16.mxu0 %v1321
        %1718 = vmatpush1.bf16.msra.mxu0 %v1320
        %1719 = vmatprep.subr.bf16.mxu0 %v1330
        %1720 = vmatpush1.bf16.msra.mxu0 %v1329
        %1721 = vmatprep.subr.bf16.mxu0 %v1339
        %1722 = vmatpush1.bf16.msra.mxu0 %v1338
        %1723 = vmatprep.subr.bf16.mxu0 %v1348
        %1724 = vmatpush1.bf16.msra.mxu0 %v1347
        %1725 = vmatprep.subr.bf16.mxu0 %v1357
        %1726 = vmatpush1.bf16.msra.mxu0 %v1356
        %1727 = vmatprep.subr.bf16.mxu0 %v1366
        %1728 = vmatpush1.bf16.msra.mxu0 %v1365
        %1729 = vmatprep.subr.bf16.mxu0 %v1375
        %1730 = vmatpush1.bf16.msra.mxu0 %v1374
        %1731 = vmatprep.subr.bf16.mxu0 %v1384
        %1732 = vmatpush1.bf16.msra.mxu0 %v1383
        %1733 = vmatprep.subr.bf16.mxu0 %v1393
        %1734 = vmatpush1.bf16.msra.mxu0 %v1392
        %1735 = vmatprep.subr.bf16.mxu0 %v1402
        %1736 = vmatpush1.bf16.msra.mxu0 %v1401
        %1737 = vmatprep.subr.bf16.mxu0 %v1411
        %1738 = vmatpush1.bf16.msra.mxu0 %v1410
        %1739 = vmatprep.mubr.bf16.mxu0 %v580
        %1740 = vmatmul.mubr.bf16.gmra.mrb[0].mxu0 %v579
        %v1741 = vpop.f32.mrb[0].mxu0
        %v1742 = vadd.f32 0.0, %v1741
        %v1743 = vpop.f32.mrb[0].mxu0
        %v1744 = vadd.f32 0.0, %v1743
        %v1745 = vpop.f32.mrb[0].mxu0
        %v1746 = vadd.f32 0.0, %v1745
        %v1747 = vpop.f32.mrb[0].mxu0
        %v1748 = vadd.f32 0.0, %v1747
        %1749 = vmatprep.mubr.bf16.mxu0 %v583
        %1750 = vmatmul.mubr.bf16.gmra.mrb[0].mxu0 %v582
        %v1751 = vpop.f32.mrb[0].mxu0
        %v1752 = vadd.f32 0.0, %v1751
        %v1753 = vpop.f32.mrb[0].mxu0
        %v1754 = vadd.f32 0.0, %v1753
        %v1755 = vpop.f32.mrb[0].mxu0
        %v1756 = vadd.f32 0.0, %v1755
        %v1757 = vpop.f32.mrb[0].mxu0
        %v1758 = vadd.f32 0.0, %v1757
        %1759 = vmatprep.mubr.bf16.mxu0 %v586
        %1760 = vmatmul.mubr.bf16.gmra.mrb[0].mxu0 %v585
        %v1761 = vpop.f32.mrb[0].mxu0
        %v1762 = vadd.f32 0.0, %v1761
        %v1763 = vpop.f32.mrb[0].mxu0
        %v1764 = vadd.f32 0.0, %v1763
        %v1765 = vpop.f32.mrb[0].mxu0
        %v1766 = vadd.f32 0.0, %v1765
        %v1767 = vpop.f32.mrb[0].mxu0
        %v1768 = vadd.f32 0.0, %v1767
        %1769 = vmatprep.mubr.bf16.mxu0 %v589
        %1770 = vmatmul.mubr.bf16.gmra.mrb[0].mxu0 %v588
        %v1771 = vpop.f32.mrb[0].mxu0
        %v1772 = vadd.f32 0.0, %v1771
        %v1773 = vpop.f32.mrb[0].mxu0
        %v1774 = vadd.f32 0.0, %v1773
        %v1775 = vpop.f32.mrb[0].mxu0
        %v1776 = vpop.f32.mrb[0].mxu0
        %1777 = vdwg.mxu0
        %1778 = vmatprep.subr.bf16.mxu0 %v1420
        %1779 = vmatpush1.bf16.msra.mxu0 %v1419
        %1780 = vmatprep.subr.bf16.mxu0 %v1429
        %1781 = vmatpush1.bf16.msra.mxu0 %v1428
        %1782 = vmatprep.subr.bf16.mxu0 %v1438
        %1783 = vmatpush1.bf16.msra.mxu0 %v1437
        %1784 = vmatprep.subr.bf16.mxu0 %v1447
        %1785 = vmatpush1.bf16.msra.mxu0 %v1446
        %1786 = vmatprep.subr.bf16.mxu0 %v1456
        %1787 = vmatpush1.bf16.msra.mxu0 %v1455
        %1788 = vmatprep.subr.bf16.mxu0 %v1465
        %1789 = vmatpush1.bf16.msra.mxu0 %v1464
        %1790 = vmatprep.subr.bf16.mxu0 %v1474
        %1791 = vmatpush1.bf16.msra.mxu0 %v1473
        %1792 = vmatprep.subr.bf16.mxu0 %v1483
        %1793 = vmatpush1.bf16.msra.mxu0 %v1482
        %1794 = vmatprep.subr.bf16.mxu0 0
        %1795 = vmatpush1.bf16.msra.mxu0 0
        %1796 = vmatprep.subr.bf16.mxu0 0
        %1797 = vmatpush1.bf16.msra.mxu0 0
        %1798 = vmatprep.subr.bf16.mxu0 0
        %1799 = vmatpush1.bf16.msra.mxu0 0
        %1800 = vmatprep.subr.bf16.mxu0 0
        %1801 = vmatpush1.bf16.msra.mxu0 0
        %1802 = vmatprep.subr.bf16.mxu0 0
        %1803 = vmatpush1.bf16.msra.mxu0 0
        %1804 = vmatprep.subr.bf16.mxu0 0
        %1805 = vmatpush1.bf16.msra.mxu0 0
        %1806 = vmatprep.subr.bf16.mxu0 0
        %1807 = vmatpush1.bf16.msra.mxu0 0
        %1808 = vmatprep.subr.bf16.mxu0 0
        %1809 = vmatpush1.bf16.msra.mxu0 0
        %1810 = vmatprep.mubr.bf16.mxu0 0
        %1811 = vmatmul.mubr.bf16.gmra.mrb[0].mxu0 %v581
        %v1812 = vpop.f32.mrb[0].mxu0
        %v1813 = vadd.f32 %v1742, %v1812
        %v1814 = vpop.f32.mrb[0].mxu0
        %v1815 = vadd.f32 %v1744, %v1814
        %v1816 = vpop.f32.mrb[0].mxu0
        %v1817 = vadd.f32 %v1746, %v1816
        %v1818 = vpop.f32.mrb[0].mxu0
        %v1819 = vadd.f32 %v1748, %v1818
        %1820 = vmatprep.mubr.bf16.mxu0 0
        %1821 = vmatmul.mubr.bf16.gmra.mrb[0].mxu0 %v584
        %v1822 = vpop.f32.mrb[0].mxu0
        %v1823 = vadd.f32 %v1752, %v1822
        %v1824 = vpop.f32.mrb[0].mxu0
        %v1825 = vadd.f32 %v1754, %v1824
        %v1826 = vpop.f32.mrb[0].mxu0
        %v1827 = vadd.f32 %v1756, %v1826
        %v1828 = vpop.f32.mrb[0].mxu0
        %v1829 = vadd.f32 %v1758, %v1828
        %1830 = vmatprep.mubr.bf16.mxu0 0
        %1831 = vmatmul.mubr.bf16.gmra.mrb[0].mxu0 %v587
        %v1832 = vpop.f32.mrb[0].mxu0
        %v1833 = vadd.f32 %v1762, %v1832
        %v1834 = vpop.f32.mrb[0].mxu0
        %v1835 = vadd.f32 %v1764, %v1834
        %v1836 = vpop.f32.mrb[0].mxu0
        %v1837 = vadd.f32 %v1766, %v1836
        %v1838 = vpop.f32.mrb[0].mxu0
        %v1839 = vadd.f32 %v1768, %v1838
        %1840 = vmatprep.mubr.bf16.mxu0 0
        %1841 = vmatmul.mubr.bf16.gmra.mrb[0].mxu0 %v590
        %v1842 = vpop.f32.mrb[0].mxu0
        %v1843 = vadd.f32 %v1772, %v1842
        %v1844 = vpop.f32.mrb[0].mxu0
        %v1845 = vadd.f32 %v1774, %v1844
        %v1846 = vpop.f32.mrb[0].mxu0
        %v1847 = vpop.f32.mrb[0].mxu0
        %1848 = vdwg.mxu0
        %1849 = vmatprep.subr.bf16.mxu0 %v1278
        %1850 = vmatpush1.bf16.msra.mxu0 %v1277
        %1851 = vmatprep.subr.bf16.mxu0 %v1287
        %1852 = vmatpush1.bf16.msra.mxu0 %v1286
        %1853 = vmatprep.subr.bf16.mxu0 %v1296
        %1854 = vmatpush1.bf16.msra.mxu0 %v1295
        %1855 = vmatprep.subr.bf16.mxu0 %v1305
        %1856 = vmatpush1.bf16.msra.mxu0 %v1304
        %1857 = vmatprep.subr.bf16.mxu0 %v1314
        %1858 = vmatpush1.bf16.msra.mxu0 %v1313
        %1859 = vmatprep.subr.bf16.mxu0 %v1323
        %1860 = vmatpush1.bf16.msra.mxu0 %v1322
        %1861 = vmatprep.subr.bf16.mxu0 %v1332
        %1862 = vmatpush1.bf16.msra.mxu0 %v1331
        %1863 = vmatprep.subr.bf16.mxu0 %v1341
        %1864 = vmatpush1.bf16.msra.mxu0 %v1340
        %1865 = vmatprep.subr.bf16.mxu0 %v1350
        %1866 = vmatpush1.bf16.msra.mxu0 %v1349
        %1867 = vmatprep.subr.bf16.mxu0 %v1359
        %1868 = vmatpush1.bf16.msra.mxu0 %v1358
        %1869 = vmatprep.subr.bf16.mxu0 %v1368
        %1870 = vmatpush1.bf16.msra.mxu0 %v1367
        %1871 = vmatprep.subr.bf16.mxu0 %v1377
        %1872 = vmatpush1.bf16.msra.mxu0 %v1376
        %1873 = vmatprep.subr.bf16.mxu0 %v1386
        %1874 = vmatpush1.bf16.msra.mxu0 %v1385
        %1875 = vmatprep.subr.bf16.mxu0 %v1395
        %1876 = vmatpush1.bf16.msra.mxu0 %v1394
        %1877 = vmatprep.subr.bf16.mxu0 %v1404
        %1878 = vmatpush1.bf16.msra.mxu0 %v1403
        %1879 = vmatprep.subr.bf16.mxu0 %v1413
        %1880 = vmatpush1.bf16.msra.mxu0 %v1412
        %1881 = vmatprep.mubr.bf16.mxu0 %v580
        %1882 = vmatmul.mubr.bf16.gmra.mrb[0].mxu0 %v579
        %v1883 = vpop.f32.mrb[0].mxu0
        %v1884 = vadd.f32 0.0, %v1883
        %v1885 = vpop.f32.mrb[0].mxu0
        %v1886 = vadd.f32 0.0, %v1885
        %v1887 = vpop.f32.mrb[0].mxu0
        %v1888 = vadd.f32 0.0, %v1887
        %v1889 = vpop.f32.mrb[0].mxu0
        %v1890 = vadd.f32 0.0, %v1889
        %1891 = vmatprep.mubr.bf16.mxu0 %v583
        %1892 = vmatmul.mubr.bf16.gmra.mrb[0].mxu0 %v582
        %v1893 = vpop.f32.mrb[0].mxu0
        %v1894 = vadd.f32 0.0, %v1893
        %v1895 = vpop.f32.mrb[0].mxu0
        %v1896 = vadd.f32 0.0, %v1895
        %v1897 = vpop.f32.mrb[0].mxu0
        %v1898 = vadd.f32 0.0, %v1897
        %v1899 = vpop.f32.mrb[0].mxu0
        %v1900 = vadd.f32 0.0, %v1899
        %1901 = vmatprep.mubr.bf16.mxu0 %v586
        %1902 = vmatmul.mubr.bf16.gmra.mrb[0].mxu0 %v585
        %v1903 = vpop.f32.mrb[0].mxu0
        %v1904 = vadd.f32 0.0, %v1903
        %v1905 = vpop.f32.mrb[0].mxu0
        %v1906 = vadd.f32 0.0, %v1905
        %v1907 = vpop.f32.mrb[0].mxu0
        %v1908 = vadd.f32 0.0, %v1907
        %v1909 = vpop.f32.mrb[0].mxu0
        %v1910 = vadd.f32 0.0, %v1909
        %1911 = vmatprep.mubr.bf16.mxu0 %v589
        %1912 = vmatmul.mubr.bf16.gmra.mrb[0].mxu0 %v588
        %v1913 = vpop.f32.mrb[0].mxu0
        %v1914 = vadd.f32 0.0, %v1913
        %v1915 = vpop.f32.mrb[0].mxu0
        %v1916 = vadd.f32 0.0, %v1915
        %v1917 = vpop.f32.mrb[0].mxu0
        %v1918 = vpop.f32.mrb[0].mxu0
        %1919 = vdwg.mxu0
        %1920 = vmatprep.subr.bf16.mxu0 %v1422
        %1921 = vmatpush1.bf16.msra.mxu0 %v1421
        %1922 = vmatprep.subr.bf16.mxu0 %v1431
        %1923 = vmatpush1.bf16.msra.mxu0 %v1430
        %1924 = vmatprep.subr.bf16.mxu0 %v1440
        %1925 = vmatpush1.bf16.msra.mxu0 %v1439
        %1926 = vmatprep.subr.bf16.mxu0 %v1449
        %1927 = vmatpush1.bf16.msra.mxu0 %v1448
        %1928 = vmatprep.subr.bf16.mxu0 %v1458
        %1929 = vmatpush1.bf16.msra.mxu0 %v1457
        %1930 = vmatprep.subr.bf16.mxu0 %v1467
        %1931 = vmatpush1.bf16.msra.mxu0 %v1466
        %1932 = vmatprep.subr.bf16.mxu0 %v1476
        %1933 = vmatpush1.bf16.msra.mxu0 %v1475
        %1934 = vmatprep.subr.bf16.mxu0 %v1485
        %1935 = vmatpush1.bf16.msra.mxu0 %v1484
        %1936 = vmatprep.subr.bf16.mxu0 0
        %1937 = vmatpush1.bf16.msra.mxu0 0
        %1938 = vmatprep.subr.bf16.mxu0 0
        %1939 = vmatpush1.bf16.msra.mxu0 0
        %1940 = vmatprep.subr.bf16.mxu0 0
        %1941 = vmatpush1.bf16.msra.mxu0 0
        %1942 = vmatprep.subr.bf16.mxu0 0
        %1943 = vmatpush1.bf16.msra.mxu0 0
        %1944 = vmatprep.subr.bf16.mxu0 0
        %1945 = vmatpush1.bf16.msra.mxu0 0
        %1946 = vmatprep.subr.bf16.mxu0 0
        %1947 = vmatpush1.bf16.msra.mxu0 0
        %1948 = vmatprep.subr.bf16.mxu0 0
        %1949 = vmatpush1.bf16.msra.mxu0 0
        %1950 = vmatprep.subr.bf16.mxu0 0
        %1951 = vmatpush1.bf16.msra.mxu0 0
        %1952 = vmatprep.mubr.bf16.mxu0 0
        %1953 = vmatmul.mubr.bf16.gmra.mrb[0].mxu0 %v581
        %v1954 = vpop.f32.mrb[0].mxu0
        %v1955 = vadd.f32 %v1884, %v1954
        %v1956 = vpop.f32.mrb[0].mxu0
        %v1957 = vadd.f32 %v1886, %v1956
        %v1958 = vpop.f32.mrb[0].mxu0
        %v1959 = vadd.f32 %v1888, %v1958
        %v1960 = vpop.f32.mrb[0].mxu0
        %v1961 = vadd.f32 %v1890, %v1960
        %1962 = vmatprep.mubr.bf16.mxu0 0
        %1963 = vmatmul.mubr.bf16.gmra.mrb[0].mxu0 %v584
        %v1964 = vpop.f32.mrb[0].mxu0
        %v1965 = vadd.f32 %v1894, %v1964
        %v1966 = vpop.f32.mrb[0].mxu0
        %v1967 = vadd.f32 %v1896, %v1966
        %v1968 = vpop.f32.mrb[0].mxu0
        %v1969 = vadd.f32 %v1898, %v1968
        %v1970 = vpop.f32.mrb[0].mxu0
        %v1971 = vadd.f32 %v1900, %v1970
        %1972 = vmatprep.mubr.bf16.mxu0 0
        %1973 = vmatmul.mubr.bf16.gmra.mrb[0].mxu0 %v587
        %v1974 = vpop.f32.mrb[0].mxu0
        %v1975 = vadd.f32 %v1904, %v1974
        %v1976 = vpop.f32.mrb[0].mxu0
        %v1977 = vadd.f32 %v1906, %v1976
        %v1978 = vpop.f32.mrb[0].mxu0
        %v1979 = vadd.f32 %v1908, %v1978
        %v1980 = vpop.f32.mrb[0].mxu0
        %v1981 = vadd.f32 %v1910, %v1980
        %1982 = vmatprep.mubr.bf16.mxu0 0
        %1983 = vmatmul.mubr.bf16.gmra.mrb[0].mxu0 %v590
        %v1984 = vpop.f32.mrb[0].mxu0
        %v1985 = vadd.f32 %v1914, %v1984
        %v1986 = vpop.f32.mrb[0].mxu0
        %v1987 = vadd.f32 %v1916, %v1986
        %v1988 = vpop.f32.mrb[0].mxu0
        %v1989 = vpop.f32.mrb[0].mxu0
        %1990 = vdwg.mxu0
        %1991 = vmatprep.subr.bf16.mxu0 %v1280
        %1992 = vmatpush1.bf16.msra.mxu0 %v1279
        %1993 = vmatprep.subr.bf16.mxu0 %v1289
        %1994 = vmatpush1.bf16.msra.mxu0 %v1288
        %1995 = vmatprep.subr.bf16.mxu0 %v1298
        %1996 = vmatpush1.bf16.msra.mxu0 %v1297
        %1997 = vmatprep.subr.bf16.mxu0 %v1307
        %1998 = vmatpush1.bf16.msra.mxu0 %v1306
        %1999 = vmatprep.subr.bf16.mxu0 %v1316
        %2000 = vmatpush1.bf16.msra.mxu0 %v1315
        %2001 = vmatprep.subr.bf16.mxu0 %v1325
        %2002 = vmatpush1.bf16.msra.mxu0 %v1324
        %2003 = vmatprep.subr.bf16.mxu0 %v1334
        %2004 = vmatpush1.bf16.msra.mxu0 %v1333
        %2005 = vmatprep.subr.bf16.mxu0 %v1343
        %2006 = vmatpush1.bf16.msra.mxu0 %v1342
        %2007 = vmatprep.subr.bf16.mxu0 %v1352
        %2008 = vmatpush1.bf16.msra.mxu0 %v1351
        %2009 = vmatprep.subr.bf16.mxu0 %v1361
        %2010 = vmatpush1.bf16.msra.mxu0 %v1360
        %2011 = vmatprep.subr.bf16.mxu0 %v1370
        %2012 = vmatpush1.bf16.msra.mxu0 %v1369
        %2013 = vmatprep.subr.bf16.mxu0 %v1379
        %2014 = vmatpush1.bf16.msra.mxu0 %v1378
        %2015 = vmatprep.subr.bf16.mxu0 %v1388
        %2016 = vmatpush1.bf16.msra.mxu0 %v1387
        %2017 = vmatprep.subr.bf16.mxu0 %v1397
        %2018 = vmatpush1.bf16.msra.mxu0 %v1396
        %2019 = vmatprep.subr.bf16.mxu0 %v1406
        %2020 = vmatpush1.bf16.msra.mxu0 %v1405
        %2021 = vmatprep.subr.bf16.mxu0 %v1415
        %2022 = vmatpush1.bf16.msra.mxu0 %v1414
        %2023 = vmatprep.mubr.bf16.mxu0 %v580
        %2024 = vmatmul.mubr.bf16.gmra.mrb[0].mxu0 %v579
        %v2025 = vpop.f32.mrb[0].mxu0
        %v2026 = vadd.f32 0.0, %v2025
        %v2027 = vpop.f32.mrb[0].mxu0
        %v2028 = vadd.f32 0.0, %v2027
        %v2029 = vpop.f32.mrb[0].mxu0
        %v2030 = vadd.f32 0.0, %v2029
        %v2031 = vpop.f32.mrb[0].mxu0
        %v2032 = vadd.f32 0.0, %v2031
        %2033 = vmatprep.mubr.bf16.mxu0 %v583
        %2034 = vmatmul.mubr.bf16.gmra.mrb[0].mxu0 %v582
        %v2035 = vpop.f32.mrb[0].mxu0
        %v2036 = vadd.f32 0.0, %v2035
        %v2037 = vpop.f32.mrb[0].mxu0
        %v2038 = vadd.f32 0.0, %v2037
        %v2039 = vpop.f32.mrb[0].mxu0
        %v2040 = vadd.f32 0.0, %v2039
        %v2041 = vpop.f32.mrb[0].mxu0
        %v2042 = vadd.f32 0.0, %v2041
        %2043 = vmatprep.mubr.bf16.mxu0 %v586
        %2044 = vmatmul.mubr.bf16.gmra.mrb[0].mxu0 %v585
        %v2045 = vpop.f32.mrb[0].mxu0
        %v2046 = vadd.f32 0.0, %v2045
        %v2047 = vpop.f32.mrb[0].mxu0
        %v2048 = vadd.f32 0.0, %v2047
        %v2049 = vpop.f32.mrb[0].mxu0
        %v2050 = vadd.f32 0.0, %v2049
        %v2051 = vpop.f32.mrb[0].mxu0
        %v2052 = vadd.f32 0.0, %v2051
        %2053 = vmatprep.mubr.bf16.mxu0 %v589
        %2054 = vmatmul.mubr.bf16.gmra.mrb[0].mxu0 %v588
        %v2055 = vpop.f32.mrb[0].mxu0
        %v2056 = vadd.f32 0.0, %v2055
        %v2057 = vpop.f32.mrb[0].mxu0
        %v2058 = vadd.f32 0.0, %v2057
        %v2059 = vpop.f32.mrb[0].mxu0
        %v2060 = vpop.f32.mrb[0].mxu0
        %2061 = vdwg.mxu0
        %2062 = vmatprep.subr.bf16.mxu0 %v1424
        %2063 = vmatpush1.bf16.msra.mxu0 %v1423
        %2064 = vmatprep.subr.bf16.mxu0 %v1433
        %2065 = vmatpush1.bf16.msra.mxu0 %v1432
        %2066 = vmatprep.subr.bf16.mxu0 %v1442
        %2067 = vmatpush1.bf16.msra.mxu0 %v1441
        %2068 = vmatprep.subr.bf16.mxu0 %v1451
        %2069 = vmatpush1.bf16.msra.mxu0 %v1450
        %2070 = vmatprep.subr.bf16.mxu0 %v1460
        %2071 = vmatpush1.bf16.msra.mxu0 %v1459
        %2072 = vmatprep.subr.bf16.mxu0 %v1469
        %2073 = vmatpush1.bf16.msra.mxu0 %v1468
        %2074 = vmatprep.subr.bf16.mxu0 %v1478
        %2075 = vmatpush1.bf16.msra.mxu0 %v1477
        %2076 = vmatprep.subr.bf16.mxu0 %v1487
        %2077 = vmatpush1.bf16.msra.mxu0 %v1486
        %2078 = vmatprep.subr.bf16.mxu0 0
        %2079 = vmatpush1.bf16.msra.mxu0 0
        %2080 = vmatprep.subr.bf16.mxu0 0
        %2081 = vmatpush1.bf16.msra.mxu0 0
        %2082 = vmatprep.subr.bf16.mxu0 0
        %2083 = vmatpush1.bf16.msra.mxu0 0
        %2084 = vmatprep.subr.bf16.mxu0 0
        %2085 = vmatpush1.bf16.msra.mxu0 0
        %2086 = vmatprep.subr.bf16.mxu0 0
        %2087 = vmatpush1.bf16.msra.mxu0 0
        %2088 = vmatprep.subr.bf16.mxu0 0
        %2089 = vmatpush1.bf16.msra.mxu0 0
        %2090 = vmatprep.subr.bf16.mxu0 0
        %2091 = vmatpush1.bf16.msra.mxu0 0
        %2092 = vmatprep.subr.bf16.mxu0 0
        %2093 = vmatpush1.bf16.msra.mxu0 0
        %2094 = vmatprep.mubr.bf16.mxu0 0
        %2095 = vmatmul.mubr.bf16.gmra.mrb[0].mxu0 %v581
        %v2096 = vpop.f32.mrb[0].mxu0
        %v2097 = vadd.f32 %v2026, %v2096
        %v2098 = vpop.f32.mrb[0].mxu0
        %v2099 = vadd.f32 %v2028, %v2098
        %v2100 = vpop.f32.mrb[0].mxu0
        %v2101 = vadd.f32 %v2030, %v2100
        %v2102 = vpop.f32.mrb[0].mxu0
        %v2103 = vadd.f32 %v2032, %v2102
        %2104 = vmatprep.mubr.bf16.mxu0 0
        %2105 = vmatmul.mubr.bf16.gmra.mrb[0].mxu0 %v584
        %v2106 = vpop.f32.mrb[0].mxu0
        %v2107 = vadd.f32 %v2036, %v2106
        %v2108 = vpop.f32.mrb[0].mxu0
        %v2109 = vadd.f32 %v2038, %v2108
        %v2110 = vpop.f32.mrb[0].mxu0
        %v2111 = vadd.f32 %v2040, %v2110
        %v2112 = vpop.f32.mrb[0].mxu0
        %v2113 = vadd.f32 %v2042, %v2112
        %2114 = vmatprep.mubr.bf16.mxu0 0
        %2115 = vmatmul.mubr.bf16.gmra.mrb[0].mxu0 %v587
        %v2116 = vpop.f32.mrb[0].mxu0
        %v2117 = vadd.f32 %v2046, %v2116
        %v2118 = vpop.f32.mrb[0].mxu0
        %v2119 = vadd.f32 %v2048, %v2118
        %v2120 = vpop.f32.mrb[0].mxu0
        %v2121 = vadd.f32 %v2050, %v2120
        %v2122 = vpop.f32.mrb[0].mxu0
        %v2123 = vadd.f32 %v2052, %v2122
        %2124 = vmatprep.mubr.bf16.mxu0 0
        %2125 = vmatmul.mubr.bf16.gmra.mrb[0].mxu0 %v590
        %v2126 = vpop.f32.mrb[0].mxu0
        %v2127 = vadd.f32 %v2056, %v2126
        %v2128 = vpop.f32.mrb[0].mxu0
        %v2129 = vadd.f32 %v2058, %v2128
        %v2130 = vpop.f32.mrb[0].mxu0
        %v2131 = vpop.f32.mrb[0].mxu0
        %2132 = vdwg.mxu0
        %2133 = vmatprep.subr.bf16.mxu0 %v1282
        %2134 = vmatpush1.bf16.msra.mxu0 %v1281
        %2135 = vmatprep.subr.bf16.mxu0 %v1291
        %2136 = vmatpush1.bf16.msra.mxu0 %v1290
        %2137 = vmatprep.subr.bf16.mxu0 %v1300
        %2138 = vmatpush1.bf16.msra.mxu0 %v1299
        %2139 = vmatprep.subr.bf16.mxu0 %v1309
        %2140 = vmatpush1.bf16.msra.mxu0 %v1308
        %2141 = vmatprep.subr.bf16.mxu0 %v1318
        %2142 = vmatpush1.bf16.msra.mxu0 %v1317
        %2143 = vmatprep.subr.bf16.mxu0 %v1327
        %2144 = vmatpush1.bf16.msra.mxu0 %v1326
        %2145 = vmatprep.subr.bf16.mxu0 %v1336
        %2146 = vmatpush1.bf16.msra.mxu0 %v1335
        %2147 = vmatprep.subr.bf16.mxu0 %v1345
        %2148 = vmatpush1.bf16.msra.mxu0 %v1344
        %2149 = vmatprep.subr.bf16.mxu0 %v1354
        %2150 = vmatpush1.bf16.msra.mxu0 %v1353
        %2151 = vmatprep.subr.bf16.mxu0 %v1363
        %2152 = vmatpush1.bf16.msra.mxu0 %v1362
        %2153 = vmatprep.subr.bf16.mxu0 %v1372
        %2154 = vmatpush1.bf16.msra.mxu0 %v1371
        %2155 = vmatprep.subr.bf16.mxu0 %v1381
        %2156 = vmatpush1.bf16.msra.mxu0 %v1380
        %2157 = vmatprep.subr.bf16.mxu0 %v1390
        %2158 = vmatpush1.bf16.msra.mxu0 %v1389
        %2159 = vmatprep.subr.bf16.mxu0 %v1399
        %2160 = vmatpush1.bf16.msra.mxu0 %v1398
        %2161 = vmatprep.subr.bf16.mxu0 %v1408
        %2162 = vmatpush1.bf16.msra.mxu0 %v1407
        %2163 = vmatprep.subr.bf16.mxu0 %v1417
        %2164 = vmatpush1.bf16.msra.mxu0 %v1416
        %2165 = vmatprep.mubr.bf16.mxu0 %v580
        %2166 = vmatmul.mubr.bf16.gmra.mrb[0].mxu0 %v579
        %v2167 = vpop.f32.mrb[0].mxu0
        %v2168 = vadd.f32 0.0, %v2167
        %v2169 = vpop.f32.mrb[0].mxu0
        %v2170 = vadd.f32 0.0, %v2169
        %v2171 = vpop.f32.mrb[0].mxu0
        %v2172 = vadd.f32 0.0, %v2171
        %v2173 = vpop.f32.mrb[0].mxu0
        %v2174 = vadd.f32 0.0, %v2173
        %2175 = vmatprep.mubr.bf16.mxu0 %v583
        %2176 = vmatmul.mubr.bf16.gmra.mrb[0].mxu0 %v582
        %v2177 = vpop.f32.mrb[0].mxu0
        %v2178 = vadd.f32 0.0, %v2177
        %v2179 = vpop.f32.mrb[0].mxu0
        %v2180 = vadd.f32 0.0, %v2179
        %v2181 = vpop.f32.mrb[0].mxu0
        %v2182 = vadd.f32 0.0, %v2181
        %v2183 = vpop.f32.mrb[0].mxu0
        %v2184 = vadd.f32 0.0, %v2183
        %2185 = vmatprep.mubr.bf16.mxu0 %v586
        %2186 = vmatmul.mubr.bf16.gmra.mrb[0].mxu0 %v585
        %v2187 = vpop.f32.mrb[0].mxu0
        %v2188 = vadd.f32 0.0, %v2187
        %v2189 = vpop.f32.mrb[0].mxu0
        %v2190 = vadd.f32 0.0, %v2189
        %v2191 = vpop.f32.mrb[0].mxu0
        %v2192 = vadd.f32 0.0, %v2191
        %v2193 = vpop.f32.mrb[0].mxu0
        %v2194 = vadd.f32 0.0, %v2193
        %2195 = vmatprep.mubr.bf16.mxu0 %v589
        %2196 = vmatmul.mubr.bf16.gmra.mrb[0].mxu0 %v588
        %v2197 = vpop.f32.mrb[0].mxu0
        %v2198 = vadd.f32 0.0, %v2197
        %v2199 = vpop.f32.mrb[0].mxu0
        %v2200 = vadd.f32 0.0, %v2199
        %v2201 = vpop.f32.mrb[0].mxu0
        %v2202 = vpop.f32.mrb[0].mxu0
        %2203 = vdwg.mxu0
        %2204 = vmatprep.subr.bf16.mxu0 %v1426
        %2205 = vmatpush1.bf16.msra.mxu0 %v1425
        %2206 = vmatprep.subr.bf16.mxu0 %v1435
        %2207 = vmatpush1.bf16.msra.mxu0 %v1434
        %2208 = vmatprep.subr.bf16.mxu0 %v1444
        %2209 = vmatpush1.bf16.msra.mxu0 %v1443
        %2210 = vmatprep.subr.bf16.mxu0 %v1453
        %2211 = vmatpush1.bf16.msra.mxu0 %v1452
        %2212 = vmatprep.subr.bf16.mxu0 %v1462
        %2213 = vmatpush1.bf16.msra.mxu0 %v1461
        %2214 = vmatprep.subr.bf16.mxu0 %v1471
        %2215 = vmatpush1.bf16.msra.mxu0 %v1470
        %2216 = vmatprep.subr.bf16.mxu0 %v1480
        %2217 = vmatpush1.bf16.msra.mxu0 %v1479
        %2218 = vmatprep.subr.bf16.mxu0 %v1489
        %2219 = vmatpush1.bf16.msra.mxu0 %v1488
        %2220 = vmatprep.subr.bf16.mxu0 0
        %2221 = vmatpush1.bf16.msra.mxu0 0
        %2222 = vmatprep.subr.bf16.mxu0 0
        %2223 = vmatpush1.bf16.msra.mxu0 0
        %2224 = vmatprep.subr.bf16.mxu0 0
        %2225 = vmatpush1.bf16.msra.mxu0 0
        %2226 = vmatprep.subr.bf16.mxu0 0
        %2227 = vmatpush1.bf16.msra.mxu0 0
        %2228 = vmatprep.subr.bf16.mxu0 0
        %2229 = vmatpush1.bf16.msra.mxu0 0
        %2230 = vmatprep.subr.bf16.mxu0 0
        %2231 = vmatpush1.bf16.msra.mxu0 0
        %2232 = vmatprep.subr.bf16.mxu0 0
        %2233 = vmatpush1.bf16.msra.mxu0 0
        %2234 = vmatprep.subr.bf16.mxu0 0
        %2235 = vmatpush1.bf16.msra.mxu0 0
        %2236 = vmatprep.mubr.bf16.mxu0 0
        %2237 = vmatmul.mubr.bf16.gmra.mrb[0].mxu0 %v581
        %v2238 = vpop.f32.mrb[0].mxu0
        %v2239 = vadd.f32 %v2168, %v2238
        %v2240 = vpop.f32.mrb[0].mxu0
        %v2241 = vadd.f32 %v2170, %v2240
        %v2242 = vpop.f32.mrb[0].mxu0
        %v2243 = vadd.f32 %v2172, %v2242
        %v2244 = vpop.f32.mrb[0].mxu0
        %v2245 = vadd.f32 %v2174, %v2244
        %2246 = vmatprep.mubr.bf16.mxu0 0
        %2247 = vmatmul.mubr.bf16.gmra.mrb[0].mxu0 %v584
        %v2248 = vpop.f32.mrb[0].mxu0
        %v2249 = vadd.f32 %v2178, %v2248
        %v2250 = vpop.f32.mrb[0].mxu0
        %v2251 = vadd.f32 %v2180, %v2250
        %v2252 = vpop.f32.mrb[0].mxu0
        %v2253 = vadd.f32 %v2182, %v2252
        %v2254 = vpop.f32.mrb[0].mxu0
        %v2255 = vadd.f32 %v2184, %v2254
        %2256 = vmatprep.mubr.bf16.mxu0 0
        %2257 = vmatmul.mubr.bf16.gmra.mrb[0].mxu0 %v587
        %v2258 = vpop.f32.mrb[0].mxu0
        %v2259 = vadd.f32 %v2188, %v2258
        %v2260 = vpop.f32.mrb[0].mxu0
        %v2261 = vadd.f32 %v2190, %v2260
        %v2262 = vpop.f32.mrb[0].mxu0
        %v2263 = vadd.f32 %v2192, %v2262
        %v2264 = vpop.f32.mrb[0].mxu0
        %v2265 = vadd.f32 %v2194, %v2264
        %2266 = vmatprep.mubr.bf16.mxu0 0
        %2267 = vmatmul.mubr.bf16.gmra.mrb[0].mxu0 %v590
        %v2268 = vpop.f32.mrb[0].mxu0
        %v2269 = vadd.f32 %v2198, %v2268
        %v2270 = vpop.f32.mrb[0].mxu0
        %v2271 = vadd.f32 %v2200, %v2270
        %v2272 = vpop.f32.mrb[0].mxu0
        %v2273 = vpop.f32.mrb[0].mxu0
        %2274 = vdwg.mxu0
        %2275 = vmatprep.subr.bf16.mxu0 0
        %2276 = vmatpush1.bf16.msra.mxu0 %v1283
        %2277 = vmatprep.subr.bf16.mxu0 0
        %2278 = vmatpush1.bf16.msra.mxu0 %v1292
        %2279 = vmatprep.subr.bf16.mxu0 0
        %2280 = vmatpush1.bf16.msra.mxu0 %v1301
        %2281 = vmatprep.subr.bf16.mxu0 0
        %2282 = vmatpush1.bf16.msra.mxu0 %v1310
        %2283 = vmatprep.subr.bf16.mxu0 0
        %2284 = vmatpush1.bf16.msra.mxu0 %v1319
        %2285 = vmatprep.subr.bf16.mxu0 0
        %2286 = vmatpush1.bf16.msra.mxu0 %v1328
        %2287 = vmatprep.subr.bf16.mxu0 0
        %2288 = vmatpush1.bf16.msra.mxu0 %v1337
        %2289 = vmatprep.subr.bf16.mxu0 0
        %2290 = vmatpush1.bf16.msra.mxu0 %v1346
        %2291 = vmatprep.subr.bf16.mxu0 0
        %2292 = vmatpush1.bf16.msra.mxu0 %v1355
        %2293 = vmatprep.subr.bf16.mxu0 0
        %2294 = vmatpush1.bf16.msra.mxu0 %v1364
        %2295 = vmatprep.subr.bf16.mxu0 0
        %2296 = vmatpush1.bf16.msra.mxu0 %v1373
        %2297 = vmatprep.subr.bf16.mxu0 0
        %2298 = vmatpush1.bf16.msra.mxu0 %v1382
        %2299 = vmatprep.subr.bf16.mxu0 0
        %2300 = vmatpush1.bf16.msra.mxu0 %v1391
        %2301 = vmatprep.subr.bf16.mxu0 0
        %2302 = vmatpush1.bf16.msra.mxu0 %v1400
        %2303 = vmatprep.subr.bf16.mxu0 0
        %2304 = vmatpush1.bf16.msra.mxu0 %v1409
        %2305 = vmatprep.subr.bf16.mxu0 0
        %2306 = vmatpush1.bf16.msra.mxu0 %v1418
        %2307 = vmatprep.mubr.bf16.mxu0 %v580
        %2308 = vmatmul.mubr.bf16.gmra.mrb[0].mxu0 %v579
        %v2309 = vpop.f32.mrb[0].mxu0
        %v2310 = vadd.f32 0.0, %v2309
        %v2311 = vpop.f32.mrb[0].mxu0
        %v2312 = vpop.f32.mrb[0].mxu0
        %v2313 = vadd.f32 0.0, %v2312
        %v2314 = vpop.f32.mrb[0].mxu0
        %2315 = vmatprep.mubr.bf16.mxu0 %v583
        %2316 = vmatmul.mubr.bf16.gmra.mrb[0].mxu0 %v582
        %v2317 = vpop.f32.mrb[0].mxu0
        %v2318 = vadd.f32 0.0, %v2317
        %v2319 = vpop.f32.mrb[0].mxu0
        %v2320 = vpop.f32.mrb[0].mxu0
        %v2321 = vadd.f32 0.0, %v2320
        %v2322 = vpop.f32.mrb[0].mxu0
        %2323 = vmatprep.mubr.bf16.mxu0 %v586
        %2324 = vmatmul.mubr.bf16.gmra.mrb[0].mxu0 %v585
        %v2325 = vpop.f32.mrb[0].mxu0
        %v2326 = vadd.f32 0.0, %v2325
        %v2327 = vpop.f32.mrb[0].mxu0
        %v2328 = vpop.f32.mrb[0].mxu0
        %v2329 = vadd.f32 0.0, %v2328
        %v2330 = vpop.f32.mrb[0].mxu0
        %2331 = vmatprep.mubr.bf16.mxu0 %v589
        %2332 = vmatmul.mubr.bf16.gmra.mrb[0].mxu0 %v588
        %v2333 = vpop.f32.mrb[0].mxu0
        %v2334 = vadd.f32 0.0, %v2333
        %v2335 = vpop.f32.mrb[0].mxu0
        %v2336 = vpop.f32.mrb[0].mxu0
        %v2337 = vpop.f32.mrb[0].mxu0
        %2338 = vdwg.mxu0
        %2339 = vmatprep.subr.bf16.mxu0 0
        %2340 = vmatpush1.bf16.msra.mxu0 %v1427
        %2341 = vmatprep.subr.bf16.mxu0 0
        %2342 = vmatpush1.bf16.msra.mxu0 %v1436
        %2343 = vmatprep.subr.bf16.mxu0 0
        %2344 = vmatpush1.bf16.msra.mxu0 %v1445
        %2345 = vmatprep.subr.bf16.mxu0 0
        %2346 = vmatpush1.bf16.msra.mxu0 %v1454
        %2347 = vmatprep.subr.bf16.mxu0 0
        %2348 = vmatpush1.bf16.msra.mxu0 %v1463
        %2349 = vmatprep.subr.bf16.mxu0 0
        %2350 = vmatpush1.bf16.msra.mxu0 %v1472
        %2351 = vmatprep.subr.bf16.mxu0 0
        %2352 = vmatpush1.bf16.msra.mxu0 %v1481
        %2353 = vmatprep.subr.bf16.mxu0 0
        %2354 = vmatpush1.bf16.msra.mxu0 %v1490
        %2355 = vmatprep.subr.bf16.mxu0 0
        %2356 = vmatpush1.bf16.msra.mxu0 0
        %2357 = vmatprep.subr.bf16.mxu0 0
        %2358 = vmatpush1.bf16.msra.mxu0 0
        %2359 = vmatprep.subr.bf16.mxu0 0
        %2360 = vmatpush1.bf16.msra.mxu0 0
        %2361 = vmatprep.subr.bf16.mxu0 0
        %2362 = vmatpush1.bf16.msra.mxu0 0
        %2363 = vmatprep.subr.bf16.mxu0 0
        %2364 = vmatpush1.bf16.msra.mxu0 0
        %2365 = vmatprep.subr.bf16.mxu0 0
        %2366 = vmatpush1.bf16.msra.mxu0 0
        %2367 = vmatprep.subr.bf16.mxu0 0
        %2368 = vmatpush1.bf16.msra.mxu0 0
        %2369 = vmatprep.subr.bf16.mxu0 0
        %2370 = vmatpush1.bf16.msra.mxu0 0
        %2371 = vmatprep.mubr.bf16.mxu0 0
        %2372 = vmatmul.mubr.bf16.gmra.mrb[0].mxu0 %v581
        %v2373 = vpop.f32.mrb[0].mxu0
        %v2374 = vadd.f32 %v2310, %v2373
        %v2375 = vpop.f32.mrb[0].mxu0
        %v2376 = vpop.f32.mrb[0].mxu0
        %v2377 = vadd.f32 %v2313, %v2376
        %v2378 = vpop.f32.mrb[0].mxu0
        %2379 = vmatprep.mubr.bf16.mxu0 0
        %2380 = vmatmul.mubr.bf16.gmra.mrb[0].mxu0 %v584
        %v2381 = vpop.f32.mrb[0].mxu0
        %v2382 = vadd.f32 %v2318, %v2381
        %v2383 = vpop.f32.mrb[0].mxu0
        %v2384 = vpop.f32.mrb[0].mxu0
        %v2385 = vadd.f32 %v2321, %v2384
        %v2386 = vpop.f32.mrb[0].mxu0
        %2387 = vmatprep.mubr.bf16.mxu0 0
        %2388 = vmatmul.mubr.bf16.gmra.mrb[0].mxu0 %v587
        %v2389 = vpop.f32.mrb[0].mxu0
        %v2390 = vadd.f32 %v2326, %v2389
        %v2391 = vpop.f32.mrb[0].mxu0
        %v2392 = vpop.f32.mrb[0].mxu0
        %v2393 = vadd.f32 %v2329, %v2392
        %v2394 = vpop.f32.mrb[0].mxu0
        %2395 = vmatprep.mubr.bf16.mxu0 0
        %2396 = vmatmul.mubr.bf16.gmra.mrb[0].mxu0 %v590
        %v2397 = vpop.f32.mrb[0].mxu0
        %v2398 = vadd.f32 %v2334, %v2397
        %v2399 = vpop.f32.mrb[0].mxu0
        %v2400 = vpop.f32.mrb[0].mxu0
        %v2401 = vpop.f32.mrb[0].mxu0
        %2402 = vdwg.mxu0
        %v2403 = vadd.f32 %v1813, %v1817
        %v2404 = vadd.f32 %v2403, %v1823
        %v2405 = vadd.f32 %v2404, %v1827
        %v2406 = vadd.f32 %v2405, %v1833
        %v2407 = vadd.f32 %v2406, %v1837
        %vm2408 = vcmask 1040384
        %v2409 = vsel %vm2408, %v1843, 0.0
        %v2410 = vadd.f32 %v2407, %v2409
        %v2411 = vrot.slane %v2410, 4
        %v2412 = vadd.f32 %v2410, %v2411
        %v2413 = vrot.slane %v2412, 2
        %v2414 = vadd.f32 %v2412, %v2413
        %v2415 = vrot.slane %v2414, 1
        %v2416 = vadd.f32 %v2414, %v2415
        %v2417 = vadd.f32 %v1815, %v1819
        %v2418 = vadd.f32 %v2417, %v1825
        %v2419 = vadd.f32 %v2418, %v1829
        %v2420 = vadd.f32 %v2419, %v1835
        %v2421 = vadd.f32 %v2420, %v1839
        %v2422 = vsel %vm2408, %v1845, 0.0
        %v2423 = vadd.f32 %v2421, %v2422
        %v2424 = vrot.slane %v2423, 4
        %v2425 = vadd.f32 %v2423, %v2424
        %v2426 = vrot.slane %v2425, 2
        %v2427 = vadd.f32 %v2425, %v2426
        %v2428 = vrot.slane %v2427, 1
        %v2429 = vadd.f32 %v2427, %v2428
        %v2430 = vadd.f32 %v1955, %v1959
        %v2431 = vadd.f32 %v2430, %v1965
        %v2432 = vadd.f32 %v2431, %v1969
        %v2433 = vadd.f32 %v2432, %v1975
        %v2434 = vadd.f32 %v2433, %v1979
        %v2435 = vsel %vm2408, %v1985, 0.0
        %v2436 = vadd.f32 %v2434, %v2435
        %v2437 = vrot.slane %v2436, 4
        %v2438 = vadd.f32 %v2436, %v2437
        %v2439 = vrot.slane %v2438, 2
        %v2440 = vadd.f32 %v2438, %v2439
        %v2441 = vrot.slane %v2440, 1
        %v2442 = vadd.f32 %v2440, %v2441
        %v2443 = vadd.f32 %v1957, %v1961
        %v2444 = vadd.f32 %v2443, %v1967
        %v2445 = vadd.f32 %v2444, %v1971
        %v2446 = vadd.f32 %v2445, %v1977
        %v2447 = vadd.f32 %v2446, %v1981
        %v2448 = vsel %vm2408, %v1987, 0.0
        %v2449 = vadd.f32 %v2447, %v2448
        %v2450 = vrot.slane %v2449, 4
        %v2451 = vadd.f32 %v2449, %v2450
        %v2452 = vrot.slane %v2451, 2
        %v2453 = vadd.f32 %v2451, %v2452
        %v2454 = vrot.slane %v2453, 1
        %v2455 = vadd.f32 %v2453, %v2454
        %v2456 = vadd.f32 %v2097, %v2101
        %v2457 = vadd.f32 %v2456, %v2107
        %v2458 = vadd.f32 %v2457, %v2111
        %v2459 = vadd.f32 %v2458, %v2117
        %v2460 = vadd.f32 %v2459, %v2121
        %v2461 = vsel %vm2408, %v2127, 0.0
        %v2462 = vadd.f32 %v2460, %v2461
        %v2463 = vrot.slane %v2462, 4
        %v2464 = vadd.f32 %v2462, %v2463
        %v2465 = vrot.slane %v2464, 2
        %v2466 = vadd.f32 %v2464, %v2465
        %v2467 = vrot.slane %v2466, 1
        %v2468 = vadd.f32 %v2466, %v2467
        %v2469 = vadd.f32 %v2099, %v2103
        %v2470 = vadd.f32 %v2469, %v2109
        %v2471 = vadd.f32 %v2470, %v2113
        %v2472 = vadd.f32 %v2471, %v2119
        %v2473 = vadd.f32 %v2472, %v2123
        %v2474 = vsel %vm2408, %v2129, 0.0
        %v2475 = vadd.f32 %v2473, %v2474
        %v2476 = vrot.slane %v2475, 4
        %v2477 = vadd.f32 %v2475, %v2476
        %v2478 = vrot.slane %v2477, 2
        %v2479 = vadd.f32 %v2477, %v2478
        %v2480 = vrot.slane %v2479, 1
        %v2481 = vadd.f32 %v2479, %v2480
        %v2482 = vadd.f32 %v2239, %v2243
        %v2483 = vadd.f32 %v2482, %v2249
        %v2484 = vadd.f32 %v2483, %v2253
        %v2485 = vadd.f32 %v2484, %v2259
        %v2486 = vadd.f32 %v2485, %v2263
        %v2487 = vsel %vm2408, %v2269, 0.0
        %v2488 = vadd.f32 %v2486, %v2487
        %v2489 = vrot.slane %v2488, 4
        %v2490 = vadd.f32 %v2488, %v2489
        %v2491 = vrot.slane %v2490, 2
        %v2492 = vadd.f32 %v2490, %v2491
        %v2493 = vrot.slane %v2492, 1
        %v2494 = vadd.f32 %v2492, %v2493
        %v2495 = vadd.f32 %v2241, %v2245
        %v2496 = vadd.f32 %v2495, %v2251
        %v2497 = vadd.f32 %v2496, %v2255
        %v2498 = vadd.f32 %v2497, %v2261
        %v2499 = vadd.f32 %v2498, %v2265
        %v2500 = vsel %vm2408, %v2271, 0.0
        %v2501 = vadd.f32 %v2499, %v2500
        %v2502 = vrot.slane %v2501, 4
        %v2503 = vadd.f32 %v2501, %v2502
        %v2504 = vrot.slane %v2503, 2
        %v2505 = vadd.f32 %v2503, %v2504
        %v2506 = vrot.slane %v2505, 1
        %v2507 = vadd.f32 %v2505, %v2506
        %v2508 = vadd.f32 %v2374, %v2377
        %v2509 = vadd.f32 %v2508, %v2382
        %v2510 = vadd.f32 %v2509, %v2385
        %v2511 = vadd.f32 %v2510, %v2390
        %v2512 = vadd.f32 %v2511, %v2393
        %v2513 = vsel %vm2408, %v2398, 0.0
        %v2514 = vadd.f32 %v2512, %v2513
        %v2515 = vrot.slane %v2514, 4
        %v2516 = vadd.f32 %v2514, %v2515
        %v2517 = vrot.slane %v2516, 2
        %v2518 = vadd.f32 %v2516, %v2517
        %v2519 = vrot.slane %v2518, 1
        %v2520 = vadd.f32 %v2518, %v2519
        %v2521 = vmul.f32 %v2416, 0.020408163
        %v2522 = vmul.f32 %v2429, 0.020408163
        %v2523 = vmul.f32 %v2442, 0.020408163
        %v2524 = vmul.f32 %v2455, 0.020408163
        %v2525 = vmul.f32 %v2468, 0.020408163
        %v2526 = vmul.f32 %v2481, 0.020408163
        %v2527 = vmul.f32 %v2494, 0.020408163
        %v2528 = vmul.f32 %v2507, 0.020408163
        %v2529 = vmul.f32 %v2520, 0.020408163
        %v2530 = vsub.f32 %v1813, %v2521
        %v2531 = vsub.f32 %v1815, %v2522
        %v2532 = vsub.f32 %v1955, %v2523
        %v2533 = vsub.f32 %v1957, %v2524
        %v2534 = vsub.f32 %v2097, %v2525
        %v2535 = vsub.f32 %v2099, %v2526
        %v2536 = vsub.f32 %v2239, %v2527
        %v2537 = vsub.f32 %v2241, %v2528
        %v2538 = vsub.f32 %v2374, %v2529
        %v2539 = vsub.f32 %v1817, %v2521
        %v2540 = vsub.f32 %v1819, %v2522
        %v2541 = vsub.f32 %v1959, %v2523
        %v2542 = vsub.f32 %v1961, %v2524
        %v2543 = vsub.f32 %v2101, %v2525
        %v2544 = vsub.f32 %v2103, %v2526
        %v2545 = vsub.f32 %v2243, %v2527
        %v2546 = vsub.f32 %v2245, %v2528
        %v2547 = vsub.f32 %v2377, %v2529
        %v2548 = vsub.f32 %v1823, %v2521
        %v2549 = vsub.f32 %v1825, %v2522
        %v2550 = vsub.f32 %v1965, %v2523
        %v2551 = vsub.f32 %v1967, %v2524
        %v2552 = vsub.f32 %v2107, %v2525
        %v2553 = vsub.f32 %v2109, %v2526
        %v2554 = vsub.f32 %v2249, %v2527
        %v2555 = vsub.f32 %v2251, %v2528
        %v2556 = vsub.f32 %v2382, %v2529
        %v2557 = vsub.f32 %v1827, %v2521
        %v2558 = vsub.f32 %v1829, %v2522
        %v2559 = vsub.f32 %v1969, %v2523
        %v2560 = vsub.f32 %v1971, %v2524
        %v2561 = vsub.f32 %v2111, %v2525
        %v2562 = vsub.f32 %v2113, %v2526
        %v2563 = vsub.f32 %v2253, %v2527
        %v2564 = vsub.f32 %v2255, %v2528
        %v2565 = vsub.f32 %v2385, %v2529
        %v2566 = vsub.f32 %v1833, %v2521
        %v2567 = vsub.f32 %v1835, %v2522
        %v2568 = vsub.f32 %v1975, %v2523
        %v2569 = vsub.f32 %v1977, %v2524
        %v2570 = vsub.f32 %v2117, %v2525
        %v2571 = vsub.f32 %v2119, %v2526
        %v2572 = vsub.f32 %v2259, %v2527
        %v2573 = vsub.f32 %v2261, %v2528
        %v2574 = vsub.f32 %v2390, %v2529
        %v2575 = vsub.f32 %v1837, %v2521
        %v2576 = vsub.f32 %v1839, %v2522
        %v2577 = vsub.f32 %v1979, %v2523
        %v2578 = vsub.f32 %v1981, %v2524
        %v2579 = vsub.f32 %v2121, %v2525
        %v2580 = vsub.f32 %v2123, %v2526
        %v2581 = vsub.f32 %v2263, %v2527
        %v2582 = vsub.f32 %v2265, %v2528
        %v2583 = vsub.f32 %v2393, %v2529
        %v2584 = vsub.f32 %v1843, %v2521
        %v2585 = vsub.f32 %v1845, %v2522
        %v2586 = vsub.f32 %v1985, %v2523
        %v2587 = vsub.f32 %v1987, %v2524
        %v2588 = vsub.f32 %v2127, %v2525
        %v2589 = vsub.f32 %v2129, %v2526
        %v2590 = vsub.f32 %v2269, %v2527
        %v2591 = vsub.f32 %v2271, %v2528
        %v2592 = vsub.f32 %v2398, %v2529
        %v2593 = vmul.f32 %v2530, %v2530
        %v2594 = vmul.f32 %v2531, %v2531
        %v2595 = vmul.f32 %v2532, %v2532
        %v2596 = vmul.f32 %v2533, %v2533
        %v2597 = vmul.f32 %v2534, %v2534
        %v2598 = vmul.f32 %v2535, %v2535
        %v2599 = vmul.f32 %v2536, %v2536
        %v2600 = vmul.f32 %v2537, %v2537
        %v2601 = vmul.f32 %v2538, %v2538
        %v2602 = vmul.f32 %v2539, %v2539
        %v2603 = vmul.f32 %v2540, %v2540
        %v2604 = vmul.f32 %v2541, %v2541
        %v2605 = vmul.f32 %v2542, %v2542
        %v2606 = vmul.f32 %v2543, %v2543
        %v2607 = vmul.f32 %v2544, %v2544
        %v2608 = vmul.f32 %v2545, %v2545
        %v2609 = vmul.f32 %v2546, %v2546
        %v2610 = vmul.f32 %v2547, %v2547
        %v2611 = vmul.f32 %v2548, %v2548
        %v2612 = vmul.f32 %v2549, %v2549
        %v2613 = vmul.f32 %v2550, %v2550
        %v2614 = vmul.f32 %v2551, %v2551
        %v2615 = vmul.f32 %v2552, %v2552
        %v2616 = vmul.f32 %v2553, %v2553
        %v2617 = vmul.f32 %v2554, %v2554
        %v2618 = vmul.f32 %v2555, %v2555
        %v2619 = vmul.f32 %v2556, %v2556
        %v2620 = vmul.f32 %v2557, %v2557
        %v2621 = vmul.f32 %v2558, %v2558
        %v2622 = vmul.f32 %v2559, %v2559
        %v2623 = vmul.f32 %v2560, %v2560
        %v2624 = vmul.f32 %v2561, %v2561
        %v2625 = vmul.f32 %v2562, %v2562
        %v2626 = vmul.f32 %v2563, %v2563
        %v2627 = vmul.f32 %v2564, %v2564
        %v2628 = vmul.f32 %v2565, %v2565
        %v2629 = vmul.f32 %v2566, %v2566
        %v2630 = vmul.f32 %v2567, %v2567
        %v2631 = vmul.f32 %v2568, %v2568
        %v2632 = vmul.f32 %v2569, %v2569
        %v2633 = vmul.f32 %v2570, %v2570
        %v2634 = vmul.f32 %v2571, %v2571
        %v2635 = vmul.f32 %v2572, %v2572
        %v2636 = vmul.f32 %v2573, %v2573
        %v2637 = vmul.f32 %v2574, %v2574
        %v2638 = vmul.f32 %v2575, %v2575
        %v2639 = vmul.f32 %v2576, %v2576
        %v2640 = vmul.f32 %v2577, %v2577
        %v2641 = vmul.f32 %v2578, %v2578
        %v2642 = vmul.f32 %v2579, %v2579
        %v2643 = vmul.f32 %v2580, %v2580
        %v2644 = vmul.f32 %v2581, %v2581
        %v2645 = vmul.f32 %v2582, %v2582
        %v2646 = vmul.f32 %v2583, %v2583
        %v2647 = vmul.f32 %v2584, %v2584
        %v2648 = vmul.f32 %v2585, %v2585
        %v2649 = vmul.f32 %v2586, %v2586
        %v2650 = vmul.f32 %v2587, %v2587
        %v2651 = vmul.f32 %v2588, %v2588
        %v2652 = vmul.f32 %v2589, %v2589
        %v2653 = vmul.f32 %v2590, %v2590
        %v2654 = vmul.f32 %v2591, %v2591
        %v2655 = vmul.f32 %v2592, %v2592
        %v2656 = vadd.f32 %v2593, %v2602
        %v2657 = vadd.f32 %v2656, %v2611
        %v2658 = vadd.f32 %v2657, %v2620
        %v2659 = vadd.f32 %v2658, %v2629
        %v2660 = vadd.f32 %v2659, %v2638
        %v2661 = vsel %vm2408, %v2647, 0.0
        %v2662 = vadd.f32 %v2660, %v2661
        %v2663 = vrot.slane %v2662, 4
        %v2664 = vadd.f32 %v2662, %v2663
        %v2665 = vrot.slane %v2664, 2
        %v2666 = vadd.f32 %v2664, %v2665
        %v2667 = vrot.slane %v2666, 1
        %v2668 = vadd.f32 %v2666, %v2667
        %v2669 = vadd.f32 %v2594, %v2603
        %v2670 = vadd.f32 %v2669, %v2612
        %v2671 = vadd.f32 %v2670, %v2621
        %v2672 = vadd.f32 %v2671, %v2630
        %v2673 = vadd.f32 %v2672, %v2639
        %v2674 = vsel %vm2408, %v2648, 0.0
        %v2675 = vadd.f32 %v2673, %v2674
        %v2676 = vrot.slane %v2675, 4
        %v2677 = vadd.f32 %v2675, %v2676
        %v2678 = vrot.slane %v2677, 2
        %v2679 = vadd.f32 %v2677, %v2678
        %v2680 = vrot.slane %v2679, 1
        %v2681 = vadd.f32 %v2679, %v2680
        %v2682 = vadd.f32 %v2595, %v2604
        %v2683 = vadd.f32 %v2682, %v2613
        %v2684 = vadd.f32 %v2683, %v2622
        %v2685 = vadd.f32 %v2684, %v2631
        %v2686 = vadd.f32 %v2685, %v2640
        %v2687 = vsel %vm2408, %v2649, 0.0
        %v2688 = vadd.f32 %v2686, %v2687
        %v2689 = vrot.slane %v2688, 4
        %v2690 = vadd.f32 %v2688, %v2689
        %v2691 = vrot.slane %v2690, 2
        %v2692 = vadd.f32 %v2690, %v2691
        %v2693 = vrot.slane %v2692, 1
        %v2694 = vadd.f32 %v2692, %v2693
        %v2695 = vadd.f32 %v2596, %v2605
        %v2696 = vadd.f32 %v2695, %v2614
        %v2697 = vadd.f32 %v2696, %v2623
        %v2698 = vadd.f32 %v2697, %v2632
        %v2699 = vadd.f32 %v2698, %v2641
        %v2700 = vsel %vm2408, %v2650, 0.0
        %v2701 = vadd.f32 %v2699, %v2700
        %v2702 = vrot.slane %v2701, 4
        %v2703 = vadd.f32 %v2701, %v2702
        %v2704 = vrot.slane %v2703, 2
        %v2705 = vadd.f32 %v2703, %v2704
        %v2706 = vrot.slane %v2705, 1
        %v2707 = vadd.f32 %v2705, %v2706
        %v2708 = vadd.f32 %v2597, %v2606
        %v2709 = vadd.f32 %v2708, %v2615
        %v2710 = vadd.f32 %v2709, %v2624
        %v2711 = vadd.f32 %v2710, %v2633
        %v2712 = vadd.f32 %v2711, %v2642
        %v2713 = vsel %vm2408, %v2651, 0.0
        %v2714 = vadd.f32 %v2712, %v2713
        %v2715 = vrot.slane %v2714, 4
        %v2716 = vadd.f32 %v2714, %v2715
        %v2717 = vrot.slane %v2716, 2
        %v2718 = vadd.f32 %v2716, %v2717
        %v2719 = vrot.slane %v2718, 1
        %v2720 = vadd.f32 %v2718, %v2719
        %v2721 = vadd.f32 %v2598, %v2607
        %v2722 = vadd.f32 %v2721, %v2616
        %v2723 = vadd.f32 %v2722, %v2625
        %v2724 = vadd.f32 %v2723, %v2634
        %v2725 = vadd.f32 %v2724, %v2643
        %v2726 = vsel %vm2408, %v2652, 0.0
        %v2727 = vadd.f32 %v2725, %v2726
        %v2728 = vrot.slane %v2727, 4
        %v2729 = vadd.f32 %v2727, %v2728
        %v2730 = vrot.slane %v2729, 2
        %v2731 = vadd.f32 %v2729, %v2730
        %v2732 = vrot.slane %v2731, 1
        %v2733 = vadd.f32 %v2731, %v2732
        %v2734 = vadd.f32 %v2599, %v2608
        %v2735 = vadd.f32 %v2734, %v2617
        %v2736 = vadd.f32 %v2735, %v2626
        %v2737 = vadd.f32 %v2736, %v2635
        %v2738 = vadd.f32 %v2737, %v2644
        %v2739 = vsel %vm2408, %v2653, 0.0
        %v2740 = vadd.f32 %v2738, %v2739
        %v2741 = vrot.slane %v2740, 4
        %v2742 = vadd.f32 %v2740, %v2741
        %v2743 = vrot.slane %v2742, 2
        %v2744 = vadd.f32 %v2742, %v2743
        %v2745 = vrot.slane %v2744, 1
        %v2746 = vadd.f32 %v2744, %v2745
        %v2747 = vadd.f32 %v2600, %v2609
        %v2748 = vadd.f32 %v2747, %v2618
        %v2749 = vadd.f32 %v2748, %v2627
        %v2750 = vadd.f32 %v2749, %v2636
        %v2751 = vadd.f32 %v2750, %v2645
        %v2752 = vsel %vm2408, %v2654, 0.0
        %v2753 = vadd.f32 %v2751, %v2752
        %v2754 = vrot.slane %v2753, 4
        %v2755 = vadd.f32 %v2753, %v2754
        %v2756 = vrot.slane %v2755, 2
        %v2757 = vadd.f32 %v2755, %v2756
        %v2758 = vrot.slane %v2757, 1
        %v2759 = vadd.f32 %v2757, %v2758
        %v2760 = vadd.f32 %v2601, %v2610
        %v2761 = vadd.f32 %v2760, %v2619
        %v2762 = vadd.f32 %v2761, %v2628
        %v2763 = vadd.f32 %v2762, %v2637
        %v2764 = vadd.f32 %v2763, %v2646
        %v2765 = vsel %vm2408, %v2655, 0.0
        %v2766 = vadd.f32 %v2764, %v2765
        %v2767 = vrot.slane %v2766, 4
        %v2768 = vadd.f32 %v2766, %v2767
        %v2769 = vrot.slane %v2768, 2
        %v2770 = vadd.f32 %v2768, %v2769
        %v2771 = vrot.slane %v2770, 1
        %v2772 = vadd.f32 %v2770, %v2771
        %v2773 = vmul.f32 %v2668, 0.020408163
        %v2774 = vmul.f32 %v2681, 0.020408163
        %v2775 = vmul.f32 %v2694, 0.020408163
        %v2776 = vmul.f32 %v2707, 0.020408163
        %v2777 = vmul.f32 %v2720, 0.020408163
        %v2778 = vmul.f32 %v2733, 0.020408163
        %v2779 = vmul.f32 %v2746, 0.020408163
        %v2780 = vmul.f32 %v2759, 0.020408163
        %v2781 = vmul.f32 %v2772, 0.020408163
        %v2782 = vld [vmem:[%s242] sm:$0xff]
        %v2783 = vld [vmem:[%s242 + $0x8] sm:$0x1]
        %v2784 = vadd.f32 %v2773, 0.001
        %v2785 = vadd.f32 %v2774, 0.001
        %v2786 = vadd.f32 %v2775, 0.001
        %v2787 = vadd.f32 %v2776, 0.001
        %v2788 = vadd.f32 %v2777, 0.001
        %v2789 = vadd.f32 %v2778, 0.001
        %v2790 = vadd.f32 %v2779, 0.001
        %v2791 = vadd.f32 %v2780, 0.001
        %v2792 = vadd.f32 %v2781, 0.001
        %v2793 = vrsqrt.pop %v2784
        %v2794 = vrsqrt.pop %v2785
        %v2795 = vrsqrt.pop %v2786
        %v2796 = vrsqrt.pop %v2787
        %v2797 = vrsqrt.pop %v2788
        %v2798 = vrsqrt.pop %v2789
        %v2799 = vrsqrt.pop %v2790
        %v2800 = vrsqrt.pop %v2791
        %v2801 = vrsqrt.pop %v2792
        %v2811 = vcombine.low %v2793, %v2794
        %v2812 = vcombine.low %v2795, %v2796
        %v2813 = vcombine.low %v2797, %v2798
        %v2814 = vcombine.low %v2799, %v2800
        %v2816 = vunpack.c.l.s4 1966171168
        %v2817 = vunpack.c.0.s8 %v2816
        %v2818 = vlaneseq
        %v2819 = vshrl.u32 %v2818, 7
        %v2820 = vsub.s32 %v2817, %v2819
        %v2821 = vrot.slane %v2811, %v2820
        %v2823 = vunpack.c.l.s4 1966171168
        %v2824 = vunpack.c.0.s8 %v2823
        %v2825 = vlaneseq
        %v2826 = vshrl.u32 %v2825, 7
        %v2827 = vsub.s32 %v2824, %v2826
        %v2828 = vrot.slane %v2812, %v2827
        %v2830 = vunpack.c.l.s4 1966171168
        %v2831 = vunpack.c.0.s8 %v2830
        %v2832 = vlaneseq
        %v2833 = vshrl.u32 %v2832, 7
        %v2834 = vsub.s32 %v2831, %v2833
        %v2835 = vrot.slane %v2813, %v2834
        %v2837 = vunpack.c.l.s4 1966171168
        %v2838 = vunpack.c.0.s8 %v2837
        %v2839 = vlaneseq
        %v2840 = vshrl.u32 %v2839, 7
        %v2841 = vsub.s32 %v2838, %v2840
        %v2842 = vrot.slane %v2814, %v2841
        %v2843 = vcombine.low %v2821, %v2828
        %v2844 = vcombine.low %v2835, %v2842
        %v2846 = vunpack.c.l.s4 1966171168
        %v2847 = vunpack.c.0.s8 %v2846
        %v2848 = vlaneseq
        %v2849 = vshrl.u32 %v2848, 7
        %v2850 = vsub.s32 %v2847, %v2849
        %v2851 = vrot.slane %v2843, %v2850
        %v2853 = vunpack.c.l.s4 1966171168
        %v2854 = vunpack.c.0.s8 %v2853
        %v2855 = vlaneseq
        %v2856 = vshrl.u32 %v2855, 7
        %v2857 = vsub.s32 %v2854, %v2856
        %v2858 = vrot.slane %v2844, %v2857
        %v2859 = vcombine.low %v2851, %v2858
        %v2861 = vunpack.c.l.s4 1966171168
        %v2862 = vunpack.c.0.s8 %v2861
        %v2863 = vlaneseq
        %v2864 = vshrl.u32 %v2863, 7
        %v2865 = vsub.s32 %v2862, %v2864
        %v2866 = vrot.slane %v2801, %v2865
        %v2868 = vunpack.c.l.s4 1966171168
        %v2869 = vunpack.c.0.s8 %v2868
        %v2870 = vlaneseq
        %v2871 = vshrl.u32 %v2870, 7
        %v2872 = vsub.s32 %v2869, %v2871
        %v2873 = vrot.slane %v2866, %v2872
        %v2876 = vmul.f32 %v2782, %v2859
        %v2877 = vmul.f32 %v2783, %v2873
        %v2880 = vlaneseq
        %v2881 = vshrl.u32 %v2880, 7
        %v2882 = vsub.s32 0, %v2881
        %v2883 = vrot.slane %v2876, %v2882
        %v2884 = vlaneseq
        %v2885 = vshrl.u32 %v2884, 7
        %v2886 = vsub.s32 1, %v2885
        %v2887 = vrot.slane %v2876, %v2886
        %v2888 = vlaneseq
        %v2889 = vshrl.u32 %v2888, 7
        %v2890 = vsub.s32 2, %v2889
        %v2891 = vrot.slane %v2876, %v2890
        %v2892 = vlaneseq
        %v2893 = vshrl.u32 %v2892, 7
        %v2894 = vsub.s32 3, %v2893
        %v2895 = vrot.slane %v2876, %v2894
        %v2896 = vlaneseq
        %v2897 = vshrl.u32 %v2896, 7
        %v2898 = vsub.s32 4, %v2897
        %v2899 = vrot.slane %v2876, %v2898
        %v2900 = vlaneseq
        %v2901 = vshrl.u32 %v2900, 7
        %v2902 = vsub.s32 5, %v2901
        %v2903 = vrot.slane %v2876, %v2902
        %v2904 = vlaneseq
        %v2905 = vshrl.u32 %v2904, 7
        %v2906 = vsub.s32 6, %v2905
        %v2907 = vrot.slane %v2876, %v2906
        %v2908 = vlaneseq
        %v2909 = vshrl.u32 %v2908, 7
        %v2910 = vsub.s32 7, %v2909
        %v2911 = vrot.slane %v2876, %v2910
        %v2912 = vlaneseq
        %v2913 = vshrl.u32 %v2912, 7
        %v2914 = vsub.s32 0, %v2913
        %v2915 = vrot.slane %v2877, %v2914
        %v2925 = vmul.f32 %v2530, %v2883
        %v2926 = vmul.f32 %v2531, %v2887
        %v2927 = vmul.f32 %v2532, %v2891
        %v2928 = vmul.f32 %v2533, %v2895
        %v2929 = vmul.f32 %v2534, %v2899
        %v2930 = vmul.f32 %v2535, %v2903
        %v2931 = vmul.f32 %v2536, %v2907
        %v2932 = vmul.f32 %v2537, %v2911
        %v2933 = vmul.f32 %v2538, %v2915
        %v2934 = vmul.f32 %v2539, %v2883
        %v2935 = vmul.f32 %v2540, %v2887
        %v2936 = vmul.f32 %v2541, %v2891
        %v2937 = vmul.f32 %v2542, %v2895
        %v2938 = vmul.f32 %v2543, %v2899
        %v2939 = vmul.f32 %v2544, %v2903
        %v2940 = vmul.f32 %v2545, %v2907
        %v2941 = vmul.f32 %v2546, %v2911
        %v2942 = vmul.f32 %v2547, %v2915
        %v2943 = vmul.f32 %v2548, %v2883
        %v2944 = vmul.f32 %v2549, %v2887
        %v2945 = vmul.f32 %v2550, %v2891
        %v2946 = vmul.f32 %v2551, %v2895
        %v2947 = vmul.f32 %v2552, %v2899
        %v2948 = vmul.f32 %v2553, %v2903
        %v2949 = vmul.f32 %v2554, %v2907
        %v2950 = vmul.f32 %v2555, %v2911
        %v2951 = vmul.f32 %v2556, %v2915
        %v2952 = vmul.f32 %v2557, %v2883
        %v2953 = vmul.f32 %v2558, %v2887
        %v2954 = vmul.f32 %v2559, %v2891
        %v2955 = vmul.f32 %v2560, %v2895
        %v2956 = vmul.f32 %v2561, %v2899
        %v2957 = vmul.f32 %v2562, %v2903
        %v2958 = vmul.f32 %v2563, %v2907
        %v2959 = vmul.f32 %v2564, %v2911
        %v2960 = vmul.f32 %v2565, %v2915
        %v2961 = vmul.f32 %v2566, %v2883
        %v2962 = vmul.f32 %v2567, %v2887
        %v2963 = vmul.f32 %v2568, %v2891
        %v2964 = vmul.f32 %v2569, %v2895
        %v2965 = vmul.f32 %v2570, %v2899
        %v2966 = vmul.f32 %v2571, %v2903
        %v2967 = vmul.f32 %v2572, %v2907
        %v2968 = vmul.f32 %v2573, %v2911
        %v2969 = vmul.f32 %v2574, %v2915
        %v2970 = vmul.f32 %v2575, %v2883
        %v2971 = vmul.f32 %v2576, %v2887
        %v2972 = vmul.f32 %v2577, %v2891
        %v2973 = vmul.f32 %v2578, %v2895
        %v2974 = vmul.f32 %v2579, %v2899
        %v2975 = vmul.f32 %v2580, %v2903
        %v2976 = vmul.f32 %v2581, %v2907
        %v2977 = vmul.f32 %v2582, %v2911
        %v2978 = vmul.f32 %v2583, %v2915
        %v2979 = vmul.f32 %v2584, %v2883
        %v2980 = vmul.f32 %v2585, %v2887
        %v2981 = vmul.f32 %v2586, %v2891
        %v2982 = vmul.f32 %v2587, %v2895
        %v2983 = vmul.f32 %v2588, %v2899
        %v2984 = vmul.f32 %v2589, %v2903
        %v2985 = vmul.f32 %v2590, %v2907
        %v2986 = vmul.f32 %v2591, %v2911
        %v2987 = vmul.f32 %v2592, %v2915
        %v2988 = vld [vmem:[%s251] sm:$0xff]
        %v2989 = vld [vmem:[%s251 + $0x8] sm:$0x1]
        %v2992 = vlaneseq
        %v2993 = vshrl.u32 %v2992, 7
        %v2994 = vsub.s32 0, %v2993
        %v2995 = vrot.slane %v2988, %v2994
        %v2996 = vlaneseq
        %v2997 = vshrl.u32 %v2996, 7
        %v2998 = vsub.s32 1, %v2997
        %v2999 = vrot.slane %v2988, %v2998
        %v3000 = vlaneseq
        %v3001 = vshrl.u32 %v3000, 7
        %v3002 = vsub.s32 2, %v3001
        %v3003 = vrot.slane %v2988, %v3002
        %v3004 = vlaneseq
        %v3005 = vshrl.u32 %v3004, 7
        %v3006 = vsub.s32 3, %v3005
        %v3007 = vrot.slane %v2988, %v3006
        %v3008 = vlaneseq
        %v3009 = vshrl.u32 %v3008, 7
        %v3010 = vsub.s32 4, %v3009
        %v3011 = vrot.slane %v2988, %v3010
        %v3012 = vlaneseq
        %v3013 = vshrl.u32 %v3012, 7
        %v3014 = vsub.s32 5, %v3013
        %v3015 = vrot.slane %v2988, %v3014
        %v3016 = vlaneseq
        %v3017 = vshrl.u32 %v3016, 7
        %v3018 = vsub.s32 6, %v3017
        %v3019 = vrot.slane %v2988, %v3018
        %v3020 = vlaneseq
        %v3021 = vshrl.u32 %v3020, 7
        %v3022 = vsub.s32 7, %v3021
        %v3023 = vrot.slane %v2988, %v3022
        %v3024 = vlaneseq
        %v3025 = vshrl.u32 %v3024, 7
        %v3026 = vsub.s32 0, %v3025
        %v3027 = vrot.slane %v2989, %v3026
        %v3037 = vadd.f32 %v2925, %v2995
        %v3038 = vadd.f32 %v2926, %v2999
        %v3039 = vadd.f32 %v2927, %v3003
        %v3040 = vadd.f32 %v2928, %v3007
        %v3041 = vadd.f32 %v2929, %v3011
        %v3042 = vadd.f32 %v2930, %v3015
        %v3043 = vadd.f32 %v2931, %v3019
        %v3044 = vadd.f32 %v2932, %v3023
        %v3045 = vadd.f32 %v2933, %v3027
        %v3046 = vadd.f32 %v2934, %v2995
        %v3047 = vadd.f32 %v2935, %v2999
        %v3048 = vadd.f32 %v2936, %v3003
        %v3049 = vadd.f32 %v2937, %v3007
        %v3050 = vadd.f32 %v2938, %v3011
        %v3051 = vadd.f32 %v2939, %v3015
        %v3052 = vadd.f32 %v2940, %v3019
        %v3053 = vadd.f32 %v2941, %v3023
        %v3054 = vadd.f32 %v2942, %v3027
        %v3055 = vadd.f32 %v2943, %v2995
        %v3056 = vadd.f32 %v2944, %v2999
        %v3057 = vadd.f32 %v2945, %v3003
        %v3058 = vadd.f32 %v2946, %v3007
        %v3059 = vadd.f32 %v2947, %v3011
        %v3060 = vadd.f32 %v2948, %v3015
        %v3061 = vadd.f32 %v2949, %v3019
        %v3062 = vadd.f32 %v2950, %v3023
        %v3063 = vadd.f32 %v2951, %v3027
        %v3064 = vadd.f32 %v2952, %v2995
        %v3065 = vadd.f32 %v2953, %v2999
        %v3066 = vadd.f32 %v2954, %v3003
        %v3067 = vadd.f32 %v2955, %v3007
        %v3068 = vadd.f32 %v2956, %v3011
        %v3069 = vadd.f32 %v2957, %v3015
        %v3070 = vadd.f32 %v2958, %v3019
        %v3071 = vadd.f32 %v2959, %v3023
        %v3072 = vadd.f32 %v2960, %v3027
        %v3073 = vadd.f32 %v2961, %v2995
        %v3074 = vadd.f32 %v2962, %v2999
        %v3075 = vadd.f32 %v2963, %v3003
        %v3076 = vadd.f32 %v2964, %v3007
        %v3077 = vadd.f32 %v2965, %v3011
        %v3078 = vadd.f32 %v2966, %v3015
        %v3079 = vadd.f32 %v2967, %v3019
        %v3080 = vadd.f32 %v2968, %v3023
        %v3081 = vadd.f32 %v2969, %v3027
        %v3082 = vadd.f32 %v2970, %v2995
        %v3083 = vadd.f32 %v2971, %v2999
        %v3084 = vadd.f32 %v2972, %v3003
        %v3085 = vadd.f32 %v2973, %v3007
        %v3086 = vadd.f32 %v2974, %v3011
        %v3087 = vadd.f32 %v2975, %v3015
        %v3088 = vadd.f32 %v2976, %v3019
        %v3089 = vadd.f32 %v2977, %v3023
        %v3090 = vadd.f32 %v2978, %v3027
        %v3091 = vadd.f32 %v2979, %v2995
        %v3092 = vadd.f32 %v2980, %v2999
        %v3093 = vadd.f32 %v2981, %v3003
        %v3094 = vadd.f32 %v2982, %v3007
        %v3095 = vadd.f32 %v2983, %v3011
        %v3096 = vadd.f32 %v2984, %v3015
        %v3097 = vadd.f32 %v2985, %v3019
        %v3098 = vadd.f32 %v2986, %v3023
        %v3099 = vadd.f32 %v2987, %v3027
        %3100 = vst [vmem:[%s284] sm:$0xff] %v3037
        %3101 = vst [vmem:[%s284 + $0x8] sm:$0xff] %v3038
        %3102 = vst [vmem:[%s284 + $0x10] sm:$0xff] %v3039
        %3103 = vst [vmem:[%s284 + $0x18] sm:$0xff] %v3040
        %3104 = vst [vmem:[%s284 + $0x20] sm:$0xff] %v3041
        %3105 = vst [vmem:[%s284 + $0x28] sm:$0xff] %v3042
        %3106 = vst [vmem:[%s284 + $0x30] sm:$0xff] %v3043
        %3107 = vst [vmem:[%s284 + $0x38] sm:$0xff] %v3044
        %3108 = vst [vmem:[%s284 + $0x40] sm:$0xff] %v3045
        %3109 = vst [vmem:[%s284 + $0x48] sm:$0xff] %v3046
        %3110 = vst [vmem:[%s284 + $0x50] sm:$0xff] %v3047
        %3111 = vst [vmem:[%s284 + $0x58] sm:$0xff] %v3048
        %3112 = vst [vmem:[%s284 + $0x60] sm:$0xff] %v3049
        %3113 = vst [vmem:[%s284 + $0x68] sm:$0xff] %v3050
        %3114 = vst [vmem:[%s284 + $0x70] sm:$0xff] %v3051
        %3115 = vst [vmem:[%s284 + $0x78] sm:$0xff] %v3052
        %3116 = vst [vmem:[%s284 + $0x80] sm:$0xff] %v3053
        %3117 = vst [vmem:[%s284 + $0x88] sm:$0xff] %v3054
        %3118 = vst [vmem:[%s284 + $0x90] sm:$0xff] %v3055
        %3119 = vst [vmem:[%s284 + $0x98] sm:$0xff] %v3056
        %3120 = vst [vmem:[%s284 + $0xa0] sm:$0xff] %v3057
        %3121 = vst [vmem:[%s284 + $0xa8] sm:$0xff] %v3058
        %3122 = vst [vmem:[%s284 + $0xb0] sm:$0xff] %v3059
        %3123 = vst [vmem:[%s284 + $0xb8] sm:$0xff] %v3060
        %3124 = vst [vmem:[%s284 + $0xc0] sm:$0xff] %v3061
        %3125 = vst [vmem:[%s284 + $0xc8] sm:$0xff] %v3062
        %3126 = vst [vmem:[%s284 + $0xd0] sm:$0xff] %v3063
        %3127 = vst [vmem:[%s284 + $0xd8] sm:$0xff] %v3064
        %3128 = vst [vmem:[%s284 + $0xe0] sm:$0xff] %v3065
        %3129 = vst [vmem:[%s284 + $0xe8] sm:$0xff] %v3066
        %3130 = vst [vmem:[%s284 + $0xf0] sm:$0xff] %v3067
        %3131 = vst [vmem:[%s284 + $0xf8] sm:$0xff] %v3068
        %3132 = vst [vmem:[%s284 + $0x100] sm:$0xff] %v3069
        %3133 = vst [vmem:[%s284 + $0x108] sm:$0xff] %v3070
        %3134 = vst [vmem:[%s284 + $0x110] sm:$0xff] %v3071
        %3135 = vst [vmem:[%s284 + $0x118] sm:$0xff] %v3072
        %3136 = vst [vmem:[%s284 + $0x120] sm:$0xff] %v3073
        %3137 = vst [vmem:[%s284 + $0x128] sm:$0xff] %v3074
        %3138 = vst [vmem:[%s284 + $0x130] sm:$0xff] %v3075
        %3139 = vst [vmem:[%s284 + $0x138] sm:$0xff] %v3076
        %3140 = vst [vmem:[%s284 + $0x140] sm:$0xff] %v3077
        %3141 = vst [vmem:[%s284 + $0x148] sm:$0xff] %v3078
        %3142 = vst [vmem:[%s284 + $0x150] sm:$0xff] %v3079
        %3143 = vst [vmem:[%s284 + $0x158] sm:$0xff] %v3080
        %3144 = vst [vmem:[%s284 + $0x160] sm:$0xff] %v3081
        %3145 = vst [vmem:[%s284 + $0x168] sm:$0xff] %v3082
        %3146 = vst [vmem:[%s284 + $0x170] sm:$0xff] %v3083
        %3147 = vst [vmem:[%s284 + $0x178] sm:$0xff] %v3084
        %3148 = vst [vmem:[%s284 + $0x180] sm:$0xff] %v3085
        %3149 = vst [vmem:[%s284 + $0x188] sm:$0xff] %v3086
        %3150 = vst [vmem:[%s284 + $0x190] sm:$0xff] %v3087
        %3151 = vst [vmem:[%s284 + $0x198] sm:$0xff] %v3088
        %3152 = vst [vmem:[%s284 + $0x1a0] sm:$0xff] %v3089
        %3153 = vst [vmem:[%s284 + $0x1a8] sm:$0xff] %v3090
        %3154 = vst [vmem:[%s284 + $0x1b0] sm:$0x1] %v3091
        %3155 = vst [vmem:[%s284 + $0x1b8] sm:$0x1] %v3092
        %3156 = vst [vmem:[%s284 + $0x1c0] sm:$0x1] %v3093
        %3157 = vst [vmem:[%s284 + $0x1c8] sm:$0x1] %v3094
        %3158 = vst [vmem:[%s284 + $0x1d0] sm:$0x1] %v3095
        %3159 = vst [vmem:[%s284 + $0x1d8] sm:$0x1] %v3096
        %3160 = vst [vmem:[%s284 + $0x1e0] sm:$0x1] %v3097
        %3161 = vst [vmem:[%s284 + $0x1e8] sm:$0x1] %v3098
        %3162 = vst [vmem:[%s284 + $0x1f0] sm:$0x1] %v3099
        %s3163 = sand.u32 %s128, 1
        %s3164 = sand.u32 %s128, 1
        %s3165 = smul.addr %s3164, 504
        %s3166 = scalar_lea.vmem [#allocation7], %s3165
        // Predicated region
        $region49: #{conv2d_1x1_batchnorm.1} parent=35 // pred_check
          %p3167 = pneg %p138
        $region50: #{conv2d_1x1_batchnorm.1} parent=35 // pred_check_branch
          %3169 = sbr.rel (%p3167) target = $region52
        $region51: #{conv2d_1x1_batchnorm.1} parent=35 // pred_region
          %s3170 = smul.u32 9, %s21
          %s3171 = smul.addr %s3170, 8
          %s3172 = scalar_lea.vmem %s4, %s3171
          // Predicated region
          $region53: #{conv2d_1x1_batchnorm.1} parent=51 // pred_check
            _
          $region54: #{conv2d_1x1_batchnorm.1} parent=51 // pred_check_branch
            %3174 = sbr.rel (0) target = $region56
          $region55: #{conv2d_1x1_batchnorm.1} parent=51 // pred_region
            // Predicated region
            $region57: #{conv2d_1x1_batchnorm.1} parent=55 // pred_check
              _
            $region58: #{conv2d_1x1_batchnorm.1} parent=55 // pred_check_branch
              %3176 = sbr.rel (0) target = $region60
            $region59: #{conv2d_1x1_batchnorm.1} parent=55 // pred_region
              loop: start=0, step=1, limit=1
              $region61: #{conv2d_1x1_batchnorm.1} parent=59 // loop_pre_header
                _
              $region62: #{conv2d_1x1_batchnorm.1} parent=59 // loop_header
                %s3178 = sphi 0, %s3182
                %p3179 = scmp.ge.s32.totalorder %s3178, 1
                %s3183 = sphi %s3166, %s3166
                %s3184 = sphi %s3172, %s3172
              $region63: #{conv2d_1x1_batchnorm.1} parent=59 // loop_header_branch
                %3181 = sbr.rel (%p3179) target = $region67
              $region64: #{conv2d_1x1_batchnorm.1} parent=59 // loop_body
                %v3185 = vld [vmem:[%s3183] sm:$0xff]
                %3186 = vst [vmem:[%s3184] sm:$0xff] %v3185
                %v3187 = vld [vmem:[%s3183 + $0x8] sm:$0xff]
                %3188 = vst [vmem:[%s3184 + $0x8] sm:$0xff] %v3187
                %v3189 = vld [vmem:[%s3183 + $0x10] sm:$0xff]
                %3190 = vst [vmem:[%s3184 + $0x10] sm:$0xff] %v3189
                %v3191 = vld [vmem:[%s3183 + $0x18] sm:$0xff]
                %3192 = vst [vmem:[%s3184 + $0x18] sm:$0xff] %v3191
                %v3193 = vld [vmem:[%s3183 + $0x20] sm:$0xff]
                %3194 = vst [vmem:[%s3184 + $0x20] sm:$0xff] %v3193
                %v3195 = vld [vmem:[%s3183 + $0x28] sm:$0xff]
                %3196 = vst [vmem:[%s3184 + $0x28] sm:$0xff] %v3195
                %v3197 = vld [vmem:[%s3183 + $0x30] sm:$0xff]
                %3198 = vst [vmem:[%s3184 + $0x30] sm:$0xff] %v3197
                %v3199 = vld [vmem:[%s3183 + $0x38] sm:$0xff]
                %3200 = vst [vmem:[%s3184 + $0x38] sm:$0xff] %v3199
                %v3201 = vld [vmem:[%s3183 + $0x40] sm:$0xff]
                %3202 = vst [vmem:[%s3184 + $0x40] sm:$0xff] %v3201
                %v3203 = vld [vmem:[%s3183 + $0x48] sm:$0xff]
                %3204 = vst [vmem:[%s3184 + $0x90] sm:$0xff] %v3203
                %v3205 = vld [vmem:[%s3183 + $0x50] sm:$0xff]
                %3206 = vst [vmem:[%s3184 + $0x98] sm:$0xff] %v3205
                %v3207 = vld [vmem:[%s3183 + $0x58] sm:$0xff]
                %3208 = vst [vmem:[%s3184 + $0xa0] sm:$0xff] %v3207
                %v3209 = vld [vmem:[%s3183 + $0x60] sm:$0xff]
                %3210 = vst [vmem:[%s3184 + $0xa8] sm:$0xff] %v3209
                %v3211 = vld [vmem:[%s3183 + $0x68] sm:$0xff]
                %3212 = vst [vmem:[%s3184 + $0xb0] sm:$0xff] %v3211
                %v3213 = vld [vmem:[%s3183 + $0x70] sm:$0xff]
                %3214 = vst [vmem:[%s3184 + $0xb8] sm:$0xff] %v3213
                %v3215 = vld [vmem:[%s3183 + $0x78] sm:$0xff]
                %3216 = vst [vmem:[%s3184 + $0xc0] sm:$0xff] %v3215
                %v3217 = vld [vmem:[%s3183 + $0x80] sm:$0xff]
                %3218 = vst [vmem:[%s3184 + $0xc8] sm:$0xff] %v3217
                %v3219 = vld [vmem:[%s3183 + $0x88] sm:$0xff]
                %3220 = vst [vmem:[%s3184 + $0xd0] sm:$0xff] %v3219
                %v3221 = vld [vmem:[%s3183 + $0x90] sm:$0xff]
                %3222 = vst [vmem:[%s3184 + $0x120] sm:$0xff] %v3221
                %v3223 = vld [vmem:[%s3183 + $0x98] sm:$0xff]
                %3224 = vst [vmem:[%s3184 + $0x128] sm:$0xff] %v3223
                %v3225 = vld [vmem:[%s3183 + $0xa0] sm:$0xff]
                %3226 = vst [vmem:[%s3184 + $0x130] sm:$0xff] %v3225
                %v3227 = vld [vmem:[%s3183 + $0xa8] sm:$0xff]
                %3228 = vst [vmem:[%s3184 + $0x138] sm:$0xff] %v3227
                %v3229 = vld [vmem:[%s3183 + $0xb0] sm:$0xff]
                %3230 = vst [vmem:[%s3184 + $0x140] sm:$0xff] %v3229
                %v3231 = vld [vmem:[%s3183 + $0xb8] sm:$0xff]
                %3232 = vst [vmem:[%s3184 + $0x148] sm:$0xff] %v3231
                %v3233 = vld [vmem:[%s3183 + $0xc0] sm:$0xff]
                %3234 = vst [vmem:[%s3184 + $0x150] sm:$0xff] %v3233
                %v3235 = vld [vmem:[%s3183 + $0xc8] sm:$0xff]
                %3236 = vst [vmem:[%s3184 + $0x158] sm:$0xff] %v3235
                %v3237 = vld [vmem:[%s3183 + $0xd0] sm:$0xff]
                %3238 = vst [vmem:[%s3184 + $0x160] sm:$0xff] %v3237
                %v3239 = vld [vmem:[%s3183 + $0xd8] sm:$0xff]
                %3240 = vst [vmem:[%s3184 + $0x1b0] sm:$0xff] %v3239
                %v3241 = vld [vmem:[%s3183 + $0xe0] sm:$0xff]
                %3242 = vst [vmem:[%s3184 + $0x1b8] sm:$0xff] %v3241
                %v3243 = vld [vmem:[%s3183 + $0xe8] sm:$0xff]
                %3244 = vst [vmem:[%s3184 + $0x1c0] sm:$0xff] %v3243
                %v3245 = vld [vmem:[%s3183 + $0xf0] sm:$0xff]
                %3246 = vst [vmem:[%s3184 + $0x1c8] sm:$0xff] %v3245
                %v3247 = vld [vmem:[%s3183 + $0xf8] sm:$0xff]
                %3248 = vst [vmem:[%s3184 + $0x1d0] sm:$0xff] %v3247
                %v3249 = vld [vmem:[%s3183 + $0x100] sm:$0xff]
                %3250 = vst [vmem:[%s3184 + $0x1d8] sm:$0xff] %v3249
                %v3251 = vld [vmem:[%s3183 + $0x108] sm:$0xff]
                %3252 = vst [vmem:[%s3184 + $0x1e0] sm:$0xff] %v3251
                %v3253 = vld [vmem:[%s3183 + $0x110] sm:$0xff]
                %3254 = vst [vmem:[%s3184 + $0x1e8] sm:$0xff] %v3253
                %v3255 = vld [vmem:[%s3183 + $0x118] sm:$0xff]
                %3256 = vst [vmem:[%s3184 + $0x1f0] sm:$0xff] %v3255
                %v3257 = vld [vmem:[%s3183 + $0x120] sm:$0xff]
                %3258 = vst [vmem:[%s3184 + $0x240] sm:$0xff] %v3257
                %v3259 = vld [vmem:[%s3183 + $0x128] sm:$0xff]
                %3260 = vst [vmem:[%s3184 + $0x248] sm:$0xff] %v3259
                %v3261 = vld [vmem:[%s3183 + $0x130] sm:$0xff]
                %3262 = vst [vmem:[%s3184 + $0x250] sm:$0xff] %v3261
                %v3263 = vld [vmem:[%s3183 + $0x138] sm:$0xff]
                %3264 = vst [vmem:[%s3184 + $0x258] sm:$0xff] %v3263
                %v3265 = vld [vmem:[%s3183 + $0x140] sm:$0xff]
                %3266 = vst [vmem:[%s3184 + $0x260] sm:$0xff] %v3265
                %v3267 = vld [vmem:[%s3183 + $0x148] sm:$0xff]
                %3268 = vst [vmem:[%s3184 + $0x268] sm:$0xff] %v3267
                %v3269 = vld [vmem:[%s3183 + $0x150] sm:$0xff]
                %3270 = vst [vmem:[%s3184 + $0x270] sm:$0xff] %v3269
                %v3271 = vld [vmem:[%s3183 + $0x158] sm:$0xff]
                %3272 = vst [vmem:[%s3184 + $0x278] sm:$0xff] %v3271
                %v3273 = vld [vmem:[%s3183 + $0x160] sm:$0xff]
                %3274 = vst [vmem:[%s3184 + $0x280] sm:$0xff] %v3273
                %v3275 = vld [vmem:[%s3183 + $0x168] sm:$0xff]
                %3276 = vst [vmem:[%s3184 + $0x2d0] sm:$0xff] %v3275
                %v3277 = vld [vmem:[%s3183 + $0x170] sm:$0xff]
                %3278 = vst [vmem:[%s3184 + $0x2d8] sm:$0xff] %v3277
                %v3279 = vld [vmem:[%s3183 + $0x178] sm:$0xff]
                %3280 = vst [vmem:[%s3184 + $0x2e0] sm:$0xff] %v3279
                %v3281 = vld [vmem:[%s3183 + $0x180] sm:$0xff]
                %3282 = vst [vmem:[%s3184 + $0x2e8] sm:$0xff] %v3281
                %v3283 = vld [vmem:[%s3183 + $0x188] sm:$0xff]
                %3284 = vst [vmem:[%s3184 + $0x2f0] sm:$0xff] %v3283
                %v3285 = vld [vmem:[%s3183 + $0x190] sm:$0xff]
                %3286 = vst [vmem:[%s3184 + $0x2f8] sm:$0xff] %v3285
                %v3287 = vld [vmem:[%s3183 + $0x198] sm:$0xff]
                %3288 = vst [vmem:[%s3184 + $0x300] sm:$0xff] %v3287
                %v3289 = vld [vmem:[%s3183 + $0x1a0] sm:$0xff]
                %3290 = vst [vmem:[%s3184 + $0x308] sm:$0xff] %v3289
                %v3291 = vld [vmem:[%s3183 + $0x1a8] sm:$0xff]
                %3292 = vst [vmem:[%s3184 + $0x310] sm:$0xff] %v3291
                %v3293 = vld [vmem:[%s3183 + $0x1b0] sm:$0xff]
                %3294 = vst [vmem:[%s3184 + $0x360] sm:$0xff] %v3293
                %v3295 = vld [vmem:[%s3183 + $0x1b8] sm:$0xff]
                %3296 = vst [vmem:[%s3184 + $0x368] sm:$0xff] %v3295
                %v3297 = vld [vmem:[%s3183 + $0x1c0] sm:$0xff]
                %3298 = vst [vmem:[%s3184 + $0x370] sm:$0xff] %v3297
                %v3299 = vld [vmem:[%s3183 + $0x1c8] sm:$0xff]
                %3300 = vst [vmem:[%s3184 + $0x378] sm:$0xff] %v3299
                %v3301 = vld [vmem:[%s3183 + $0x1d0] sm:$0xff]
                %3302 = vst [vmem:[%s3184 + $0x380] sm:$0xff] %v3301
                %v3303 = vld [vmem:[%s3183 + $0x1d8] sm:$0xff]
                %3304 = vst [vmem:[%s3184 + $0x388] sm:$0xff] %v3303
                %v3305 = vld [vmem:[%s3183 + $0x1e0] sm:$0xff]
                %3306 = vst [vmem:[%s3184 + $0x390] sm:$0xff] %v3305
                %v3307 = vld [vmem:[%s3183 + $0x1e8] sm:$0xff]
                %3308 = vst [vmem:[%s3184 + $0x398] sm:$0xff] %v3307
                %v3309 = vld [vmem:[%s3183 + $0x1f0] sm:$0xff]
                %3310 = vst [vmem:[%s3184 + $0x3a0] sm:$0xff] %v3309
              $region65: #{conv2d_1x1_batchnorm.1} parent=59 // loop_footer
                %s3182 = sadd.s32 1, %s3178
              $region66: #{conv2d_1x1_batchnorm.1} parent=59 // loop_footer_branch
                %3177 = sbr.rel target = $region62
              $region67: #{conv2d_1x1_batchnorm.1} parent=59 // loop_exit
                _
            $region60: #{conv2d_1x1_batchnorm.1} parent=55 // pred_fallthru
              _
            // Predicated region
            $region68: #{conv2d_1x1_batchnorm.1} parent=55 // pred_check
              _
            $region69: #{conv2d_1x1_batchnorm.1} parent=55 // pred_check_branch
              %3312 = sbr.rel target = $region71
            $region70: #{conv2d_1x1_batchnorm.1} parent=55 // pred_region
              _
            $region71: #{conv2d_1x1_batchnorm.1} parent=55 // pred_fallthru
              _
          $region56: #{conv2d_1x1_batchnorm.1} parent=51 // pred_fallthru
            _
          %3313 = vnop
        $region52: #{conv2d_1x1_batchnorm.1} parent=35 // pred_fallthru
          _
      $region36: #{conv2d_1x1_batchnorm.1} parent=5 // pred_fallthru
        _
      %p3314 = scmp.le.s32.totalorder 2, %s16
      // Predicated region
      $region72: #{conv2d_1x1_batchnorm.1} parent=5 // pred_check
        %p3315 = pneg %p3314
      $region73: #{conv2d_1x1_batchnorm.1} parent=5 // pred_check_branch
        %3317 = sbr.rel (%p3315) target = $region75
      $region74: #{conv2d_1x1_batchnorm.1} parent=5 // pred_region
        %s3318 = ssub.s32 %s16, 2
        // Predicated region
        $region76: #{conv2d_1x1_batchnorm.1} parent=74 // pred_check
          %p3319 = pneg %p144
        $region77: #{conv2d_1x1_batchnorm.1} parent=74 // pred_check_branch
          %3321 = sbr.rel (%p3319) target = $region79
        $region78: #{conv2d_1x1_batchnorm.1} parent=74 // pred_region
          %s3322 = sand.u32 %s129, 1
          %s3323 = sand.u32 %s129, 1
          %s3324 = smul.addr %s3323, 504
          %s3325 = scalar_lea.vmem [#allocation7], %s3324
        $region79: #{conv2d_1x1_batchnorm.1} parent=74 // pred_fallthru
          _
      $region75: #{conv2d_1x1_batchnorm.1} parent=5 // pred_fallthru
        _
    $region6: #{conv2d_1x1_batchnorm.1} parent=1 // loop_footer
      %s20 = sadd.s32 1, %s16
    $region7: #{conv2d_1x1_batchnorm.1} parent=1 // loop_footer_branch
      %15 = sbr.rel target = $region3
    $region8: #{conv2d_1x1_batchnorm.1} parent=1 // loop_exit
      _
    %3326 = vsyncpa [#allocation3], 1
    %s3327 = scalar_lea.sflag [#allocation3], 1
    %3328 = vsyncpa %s3327, 1
    %3329 = vsyncpa [#allocation5], 1
    %s3330 = scalar_lea.sflag [#allocation5], 1
    %3331 = vsyncpa %s3330, 1

</llo_original>
